<compile_context>
chip_gen: v6e
topology: v6e:2x2x1
jax: 0.10.0
libtpu: 0.0.40
codegen_flags: <defaults>
</compile_context>

<pallas_src>
import jax
import jax.numpy as jnp
from jax.experimental import pallas as pl
from jax.experimental.pallas import tpu as pltpu

NEG_SLOPE = 0.2       # LeakyReLU slope used throughout the trunk
EPS = 1e-5            # InstanceNorm2d default eps
HEADS_PAD = 128       # lane-dense fused-head output width


# ----------------------------------------------------------------------------
# im2col (wrapper-side layout plumbing)
# ----------------------------------------------------------------------------
def extract_patches(x, k, s, p):
    """x: (N, H, W, C) -> patches (N, H_out*W_out, k*k*C), plus (H_out, W_out)."""
    N, H, W, C = x.shape
    if p:
        x = jnp.pad(x, ((0, 0), (p, p), (p, p), (0, 0)))
    Hp, Wp = H + 2 * p, W + 2 * p
    Ho = (Hp - k) // s + 1
    Wo = (Wp - k) // s + 1
    cols = []
    for kh in range(k):
        for kw in range(k):
            cols.append(x[:, kh:kh + s * Ho:s, kw:kw + s * Wo:s, :])
    patches = jnp.stack(cols, axis=3)                    # (N, Ho, Wo, k*k, C)
    return patches.reshape(N, Ho * Wo, k * k * C), Ho, Wo


# ----------------------------------------------------------------------------
# Pallas kernels
# ----------------------------------------------------------------------------
def _conv_lrelu_kernel(p_ref, w_ref, b_ref, o_ref):
    # (M, K)bf16 @ (K, C)bf16 -> f32, + bias, LeakyReLU(0.2)
    y = jnp.dot(p_ref[...], w_ref[...], preferred_element_type=jnp.float32)
    y = y + b_ref[...]
    o_ref[...] = jnp.where(y > 0, y, NEG_SLOPE * y)


def _conv_inorm_lrelu_kernel(p_ref, w_ref, g_ref, b_ref, o_ref):
    # (M, K)bf16 @ (K, C)bf16 -> f32, InstanceNorm over the sample's M spatial
    # positions (per channel, biased variance, eps=1e-5), affine, LeakyReLU(0.2)
    y = jnp.dot(p_ref[...], w_ref[...], preferred_element_type=jnp.float32)
    mean = jnp.mean(y, axis=0, keepdims=True)
    var = jnp.mean(jnp.square(y - mean), axis=0, keepdims=True)
    y = (y - mean) * jax.lax.rsqrt(var + EPS)            # EUP rsqrt, no divide
    y = y * g_ref[...] + b_ref[...]
    o_ref[...] = jnp.where(y > 0, y, NEG_SLOPE * y)


def _heads_kernel(x_ref, w_ref, b_ref, o_ref):
    # Fused critic + classifier heads: one lane-dense (1, 128) matmul, no activation.
    o_ref[...] = (jnp.dot(x_ref[...], w_ref[...],
                          preferred_element_type=jnp.float32) + b_ref[...])


# ----------------------------------------------------------------------------
# pallas_call wrappers (grid over batch, weights VMEM-resident)
# ----------------------------------------------------------------------------
def _conv_lrelu(p, w, b):
    N, M, K = p.shape
    C = w.shape[1]
    return pl.pallas_call(
        _conv_lrelu_kernel,
        out_shape=jax.ShapeDtypeStruct((N, M, C), jnp.float32),
        grid=(N,),
        in_specs=[
            pl.BlockSpec((None, M, K), lambda i: (i, 0, 0)),
            pl.BlockSpec((K, C), lambda i: (0, 0)),
            pl.BlockSpec((1, C), lambda i: (0, 0)),
        ],
        out_specs=pl.BlockSpec((None, M, C), lambda i: (i, 0, 0)),
        compiler_params=pltpu.CompilerParams(dimension_semantics=("parallel",)),
    )(p, w, b)


def _conv_inorm_lrelu(p, w, g, b):
    N, M, K = p.shape
    C = w.shape[1]
    return pl.pallas_call(
        _conv_inorm_lrelu_kernel,
        out_shape=jax.ShapeDtypeStruct((N, M, C), jnp.float32),
        grid=(N,),
        in_specs=[
            pl.BlockSpec((None, M, K), lambda i: (i, 0, 0)),
            pl.BlockSpec((K, C), lambda i: (0, 0)),
            pl.BlockSpec((1, C), lambda i: (0, 0)),
            pl.BlockSpec((1, C), lambda i: (0, 0)),
        ],
        out_specs=pl.BlockSpec((None, M, C), lambda i: (i, 0, 0)),
        compiler_params=pltpu.CompilerParams(dimension_semantics=("parallel",)),
    )(p, w, g, b)


def _heads(feat, w, b):
    N, _, K = feat.shape
    P = w.shape[1]
    return pl.pallas_call(
        _heads_kernel,
        out_shape=jax.ShapeDtypeStruct((N, 1, P), jnp.float32),
        grid=(N,),
        in_specs=[
            pl.BlockSpec((None, 1, K), lambda i: (i, 0, 0)),
            pl.BlockSpec((K, P), lambda i: (0, 0)),
            pl.BlockSpec((1, P), lambda i: (0, 0)),
        ],
        out_specs=pl.BlockSpec((None, 1, P), lambda i: (i, 0, 0)),
        compiler_params=pltpu.CompilerParams(dimension_semantics=("parallel",)),
    )(feat, w, b)


# ----------------------------------------------------------------------------
# Forward pass
# ----------------------------------------------------------------------------
def wgan_discriminator(x, params, G_paths):
    """x: (N, C_in, H, W) f32 (NCHW, like PyTorch). Returns (critic, classifier)."""
    N = x.shape[0]
    h = jnp.transpose(x, (0, 2, 3, 1))                    # NHWC

    # Layer 1: Conv(4,2,1) + bias + LeakyReLU(0.2)
    p, Ho, Wo = extract_patches(h, 4, 2, 1)
    h = _conv_lrelu(p.astype(jnp.bfloat16), params["w1"], params["b1"])

    # Layers 2-4: Conv(4,2,1, no bias) + InstanceNorm(affine) + LeakyReLU(0.2)
    for li in (2, 3, 4):
        h = h.reshape(N, Ho, Wo, h.shape[-1])
        p, Ho, Wo = extract_patches(h, 4, 2, 1)
        h = _conv_inorm_lrelu(p.astype(jnp.bfloat16), params[f"w{li}"],
                              params[f"g{li}"], params[f"be{li}"])

    # Heads: two 4x4 valid convs over the 4x4 map == flatten + linear; fused.
    feat = h.reshape(N, 1, Ho * Wo * h.shape[-1]).astype(jnp.bfloat16)
    heads = _heads(feat, params["w_heads"], params["b_heads"]).reshape(N, -1)
    critic = heads[:, 0:1].reshape(N, 1, 1, 1)
    classifier = heads[:, 1:1 + G_paths].reshape(N, G_paths, 1, 1)
    return critic, classifier


# ----------------------------------------------------------------------------
# Pure-JAX reference (same im2col, same bf16 matmul operands, f32 accumulate)
# ----------------------------------------------------------------------------
def reference_forward(x, params, G_paths):
    N = x.shape[0]
    h = jnp.transpose(x, (0, 2, 3, 1))
    p, Ho, Wo = extract_patches(h, 4, 2, 1)
    y = jnp.einsum("nmk,kc->nmc", p.astype(jnp.bfloat16), params["w1"],
                   preferred_element_type=jnp.float32) + params["b1"]
    h = jnp.where(y > 0, y, NEG_SLOPE * y)
    for li in (2, 3, 4):
        h = h.reshape(N, Ho, Wo, h.shape[-1])
        p, Ho, Wo = extract_patches(h, 4, 2, 1)
        y = jnp.einsum("nmk,kc->nmc", p.astype(jnp.bfloat16), params[f"w{li}"],
                       preferred_element_type=jnp.float32)
        mean = jnp.mean(y, axis=1, keepdims=True)
        var = jnp.mean(jnp.square(y - mean), axis=1, keepdims=True)
        y = (y - mean) / jnp.sqrt(var + EPS)
        y = y * params[f"g{li}"] + params[f"be{li}"]
        h = jnp.where(y > 0, y, NEG_SLOPE * y)
    feat = h.reshape(N, 1, Ho * Wo * h.shape[-1]).astype(jnp.bfloat16)
    heads = (jnp.einsum("nmk,kp->nmp", feat, params["w_heads"],
                        preferred_element_type=jnp.float32)
             + params["b_heads"]).reshape(N, -1)
    critic = heads[:, 0:1].reshape(N, 1, 1, 1)
    classifier = heads[:, 1:1 + G_paths].reshape(N, G_paths, 1, 1)
    return critic, classifier


# ----------------------------------------------------------------------------
# Synthetic parameter init (mimics PyTorch Conv2d U(-1/sqrt(fan_in), +) defaults)
# Weights are stored as (KH*KW*C_in, C_out) to match the im2col feature order.
# ----------------------------------------------------------------------------
def init_params(key, channels_num, feature_disc, G_paths):
    fd = feature_disc
    keys = iter(jax.random.split(key, 16))

    def u(shape, fan_in):
        bound = 1.0 / jnp.sqrt(jnp.float32(fan_in))
        return jax.random.uniform(next(keys), shape, jnp.float32, -bound, bound)

    params = {}
    K = 16 * channels_num
    params["w1"] = u((K, fd), K).astype(jnp.bfloat16)
    params["b1"] = u((1, fd), K)

    cin = fd
    for li, cout in zip((2, 3, 4), (fd * 2, fd * 4, fd * 8)):
        K = 16 * cin
        params[f"w{li}"] = u((K, cout), K).astype(jnp.bfloat16)
        params[f"g{li}"] = 1.0 + 0.1 * jax.random.uniform(
            next(keys), (1, cout), jnp.float32, -1.0, 1.0)
        params[f"be{li}"] = 0.1 * jax.random.uniform(
            next(keys), (1, cout), jnp.float32, -1.0, 1.0)
        cin = cout

    # Fused heads: (K4, 128) with col 0 = critic, cols 1..G_paths = classifier.
    K = 16 * (fd * 8)
    assert 1 + G_paths <= HEADS_PAD
    w_out, b_out = u((K, 1), K), u((1, 1), K)
    w_cls, b_cls = u((K, G_paths), K), u((1, G_paths), K)
    w_heads = jnp.zeros((K, HEADS_PAD), jnp.float32)
    w_heads = w_heads.at[:, 0:1].set(w_out).at[:, 1:1 + G_paths].set(w_cls)
    b_heads = jnp.zeros((1, HEADS_PAD), jnp.float32)
    b_heads = b_heads.at[:, 0:1].set(b_out).at[:, 1:1 + G_paths].set(b_cls)
    params["w_heads"] = w_heads.astype(jnp.bfloat16)
    params["b_heads"] = b_heads
    return params


if __name__ == "__main__":
    key = jax.random.PRNGKey(0)
    kx, kp = jax.random.split(key)

    # Smallest spatial size the module supports is 64 (4 stride-2 convs + 4x4 heads).
    batch, channels_num, H, W = 2, 3, 64, 64
    feature_disc, G_paths = 8, 4

    x = jax.random.normal(kx, (batch, channels_num, H, W), jnp.float32)
    params = init_params(kp, channels_num, feature_disc, G_paths)

    critic, classifier = wgan_discriminator(x, params, G_paths)
    jax.block_until_ready((critic, classifier))

    critic_ref, classifier_ref = reference_forward(x, params, G_paths)

    assert critic.shape == (batch, 1, 1, 1)
    assert classifier.shape == (batch, G_paths, 1, 1)
    assert jnp.allclose(critic, critic_ref, atol=5e-3, rtol=5e-3)
    assert jnp.allclose(classifier, classifier_ref, atol=5e-3, rtol=5e-3)
    print("KERNEL_OK")
</pallas_src>

<mosaic_0001>
module attributes {stable_mosaic.version = 11 : i64} {
  func.func @_conv_lrelu_kernel(%arg0: i32, %arg1: memref<1x1024x48xbf16, #tpu.memory_space<vmem>>, %arg2: memref<48x8xbf16, #tpu.memory_space<vmem>>, %arg3: memref<1x8xf32, #tpu.memory_space<vmem>>, %arg4: memref<1x1024x8xf32, #tpu.memory_space<vmem>>) attributes {dimension_semantics = [#tpu.dimension_semantics<parallel>], iteration_bounds = array<i64: 2>, scalar_prefetch = 0 : i64, scratch_operands = 0 : i64, tpu.core_type = #tpu.core_type<tc>, window_params = [{transform_indices = @transform_0, window_bounds = array<i64: 1, 1024, 48>}, {pipeline_mode = #tpu.pipeline_mode<synchronous>, transform_indices = @transform_1, window_bounds = array<i64: 48, 8>}, {pipeline_mode = #tpu.pipeline_mode<synchronous>, transform_indices = @transform_2, window_bounds = array<i64: 1, 8>}, {transform_indices = @transform_3, window_bounds = array<i64: 1, 1024, 8>}]} {
    %c0 = arith.constant 0 : index
    %c0_0 = arith.constant 0 : index
    %c0_1 = arith.constant 0 : index
    %0 = vector.load %arg1[%c0, %c0_0, %c0_1] : memref<1x1024x48xbf16, #tpu.memory_space<vmem>>, vector<1x1024x48xbf16>
    %1 = vector.shape_cast %0 : vector<1x1024x48xbf16> to vector<1024x48xbf16>
    %c0_2 = arith.constant 0 : index
    %c0_3 = arith.constant 0 : index
    %2 = vector.load %arg2[%c0_2, %c0_3] : memref<48x8xbf16, #tpu.memory_space<vmem>>, vector<48x8xbf16>
    %cst = arith.constant dense<0.000000e+00> : vector<1024x8xf32>
    %3 = tpu.matmul %1, %2, %cst {dimension_numbers = #tpu.dot_dimension_numbers<[1], [0], [0], [1], [0, 0, 1, 1], [], []>} : vector<1024x48xbf16>, vector<48x8xbf16>, vector<1024x8xf32> -> vector<1024x8xf32>
    %c0_4 = arith.constant 0 : index
    %c0_5 = arith.constant 0 : index
    %4 = vector.load %arg3[%c0_4, %c0_5] : memref<1x8xf32, #tpu.memory_space<vmem>>, vector<1x8xf32>
    %5 = vector.broadcast %4 : vector<1x8xf32> to vector<1024x8xf32>
    %6 = arith.addf %3, %5 : vector<1024x8xf32>
    %cst_6 = arith.constant 0.000000e+00 : f32
    %7 = vector.broadcast %cst_6 : f32 to vector<1024x8xf32>
    %8 = arith.cmpf ogt, %6, %7 : vector<1024x8xf32>
    %cst_7 = arith.constant 2.000000e-01 : f32
    %9 = vector.broadcast %cst_7 : f32 to vector<1024x8xf32>
    %10 = arith.mulf %9, %6 : vector<1024x8xf32>
    %11 = arith.select %8, %6, %10 : vector<1024x8xi1>, vector<1024x8xf32>
    %c0_8 = arith.constant 0 : index
    %c0_9 = arith.constant 0 : index
    %c0_10 = arith.constant 0 : index
    %12 = vector.load %arg4[%c0_8, %c0_9, %c0_10] : memref<1x1024x8xf32, #tpu.memory_space<vmem>>, vector<1x1024x8xf32>
    %13 = vector.shape_cast %12 : vector<1x1024x8xf32> to vector<1024x8xf32>
    %14 = vector.shape_cast %11 : vector<1024x8xf32> to vector<1x1024x8xf32>
    tpu.vector_store %arg4[%c0_8, %c0_9, %c0_10], %14 {strides = array<i32>} : memref<1x1024x8xf32, #tpu.memory_space<vmem>>, vector<1x1024x8xf32>,
    return
  }
  func.func @transform_0(%arg0: i32) -> (i32, i32, i32) {
    %c0_i32 = arith.constant 0 : i32
    %c0_i32_0 = arith.constant 0 : i32
    %c0_i32_1 = arith.constant 0 : i32
    return %arg0, %c0_i32, %c0_i32_0 : i32, i32, i32
  }
  func.func @transform_1(%arg0: i32) -> (i32, i32) {
    %c0_i32 = arith.constant 0 : i32
    %c0_i32_0 = arith.constant 0 : i32
    %c0_i32_1 = arith.constant 0 : i32
    return %c0_i32, %c0_i32_0 : i32, i32
  }
  func.func @transform_2(%arg0: i32) -> (i32, i32) {
    %c0_i32 = arith.constant 0 : i32
    %c0_i32_0 = arith.constant 0 : i32
    %c0_i32_1 = arith.constant 0 : i32
    return %c0_i32, %c0_i32_0 : i32, i32
  }
  func.func @transform_3(%arg0: i32) -> (i32, i32, i32) {
    %c0_i32 = arith.constant 0 : i32
    %c0_i32_0 = arith.constant 0 : i32
    %c0_i32_1 = arith.constant 0 : i32
    return %arg0, %c0_i32, %c0_i32_0 : i32, i32, i32
  }
}

</mosaic_0001>

<llo_original>
// kernel: tpu_custom_call.1
$region0: #{tpu_custom_call.1}
  #allocation0 [shape = 'u32[]', space=smem, size = 0x4, offset = 0x4, fixed_abs, tag = 'smem constant byte address 0x4 - core index']
  #allocation1 [shape = 'u32[144,128]{1,0:T(1,128)}', space=vmem, size = 0x12000, scoped, tag = 'internal scratch']
  %s0 = inlined_call_operand.vmem [shape: bf16[2,1024,48], index: 0, kind: input, shape index: {}]
  %s1 = inlined_call_operand.vmem [shape: bf16[48,8], index: 1, kind: input, shape index: {}]
  %s2 = inlined_call_operand.vmem [shape: f32[1,8], index: 2, kind: input, shape index: {}]
  %s3 = inlined_call_operand.vmem [shape: f32[2,1024,8], index: 3, kind: output, shape index: {}]
  %s4 = sld [smem:[#allocation0]]
  $region45: #{tpu_custom_call.1} parent=0
    _
  %s6 = ssub.s32 1, %s4
  %s7 = scalar_select 0, %s6, %s4
  loop: start=0, step=1, limit=4
  $region2: #{tpu_custom_call.1} parent=0 // loop_pre_header
    _
  $region3: #{tpu_custom_call.1} parent=0 // loop_header
    %s9 = sphi 0, %s13
    %p10 = scmp.ge.s32.totalorder %s9, 4
    %s19 = sphi 0, %s21
    %s22 = sphi 0, %s19
    %s23 = sphi 0, %s22
    %s39 = sphi 0, %s23
    %s43 = sphi 0, %s43
    %s45 = sphi 0, %s43
    %s46 = sphi 0, %s45
    %s60 = sphi 0, %s46
    %s64 = sphi 0, %s64
    %s66 = sphi 0, %s64
    %s67 = sphi 0, %s66
    %s81 = sphi 0, %s67
    %s87 = sphi 0, %s89
    %s90 = sphi 0, %s87
    %s91 = sphi 0, %s90
    %s107 = sphi 0, %s91
  $region4: #{tpu_custom_call.1} parent=0 // loop_header_branch
    %12 = sbr.rel (%p10) target = $region8
  $region5: #{tpu_custom_call.1} parent=0 // loop_body
    %s14 = ssub.s32 %s9, 1
    %s15 = ssub.s32 %s9, 2
    %s16 = sadd.s32 %s9, 1
    %s17 = ssub.s32 %s9, %s16
    %p18 = scmp.eq.s32.totalorder %s17, 0
    %s20 = sadd.s32 %s19, 1
    %s21 = scalar_select %p18, %s19, %s20
    %p24 = pneg %p18
    %p25 = scmp.eq.s32.totalorder %s9, 1
    %p26 = por %p24, %p25
    %p27 = scmp.ne.s32.totalorder %s19, %s22
    %p28 = scmp.eq.s32.totalorder %s9, 0
    %p29 = por %p27, %p28
    %p30 = scmp.ne.s32.totalorder %s19, %s22
    %p31 = scmp.eq.s32.totalorder %s14, 1
    %p32 = por %p30, %p31
    %p33 = scmp.ne.s32.totalorder %s22, %s23
    %p34 = scmp.eq.s32.totalorder %s14, 0
    %p35 = por %p33, %p34
    %p36 = scmp.ne.s32.totalorder %s22, %s23
    %p37 = scmp.eq.s32.totalorder %s15, 1
    %p38 = por %p36, %p37
    %p40 = scmp.ne.s32.totalorder %s23, %s39
    %p41 = scmp.eq.s32.totalorder %s15, 0
    %p42 = por %p40, %p41
    %s44 = sadd.s32 %s43, 1
    %p47 = scmp.eq.s32.totalorder %s9, 1
    %p48 = scmp.ne.s32.totalorder %s43, %s45
    %p49 = scmp.eq.s32.totalorder %s9, 0
    %p50 = por %p48, %p49
    %p51 = scmp.ne.s32.totalorder %s43, %s45
    %p52 = scmp.eq.s32.totalorder %s14, 1
    %p53 = por %p51, %p52
    %p54 = scmp.ne.s32.totalorder %s45, %s46
    %p55 = scmp.eq.s32.totalorder %s14, 0
    %p56 = por %p54, %p55
    %p57 = scmp.ne.s32.totalorder %s45, %s46
    %p58 = scmp.eq.s32.totalorder %s15, 1
    %p59 = por %p57, %p58
    %p61 = scmp.ne.s32.totalorder %s46, %s60
    %p62 = scmp.eq.s32.totalorder %s15, 0
    %p63 = por %p61, %p62
    %s65 = sadd.s32 %s64, 1
    %p68 = scmp.eq.s32.totalorder %s9, 1
    %p69 = scmp.ne.s32.totalorder %s64, %s66
    %p70 = scmp.eq.s32.totalorder %s9, 0
    %p71 = por %p69, %p70
    %p72 = scmp.ne.s32.totalorder %s64, %s66
    %p73 = scmp.eq.s32.totalorder %s14, 1
    %p74 = por %p72, %p73
    %p75 = scmp.ne.s32.totalorder %s66, %s67
    %p76 = scmp.eq.s32.totalorder %s14, 0
    %p77 = por %p75, %p76
    %p78 = scmp.ne.s32.totalorder %s66, %s67
    %p79 = scmp.eq.s32.totalorder %s15, 1
    %p80 = por %p78, %p79
    %p82 = scmp.ne.s32.totalorder %s67, %s81
    %p83 = scmp.eq.s32.totalorder %s15, 0
    %p84 = por %p82, %p83
    %s85 = ssub.s32 %s9, %s16
    %p86 = scmp.eq.s32.totalorder %s85, 0
    %s88 = sadd.s32 %s87, 1
    %s89 = scalar_select %p86, %s87, %s88
    %p92 = pneg %p86
    %p93 = scmp.eq.s32.totalorder %s9, 1
    %p94 = por %p92, %p93
    %p95 = scmp.ne.s32.totalorder %s87, %s90
    %p96 = scmp.eq.s32.totalorder %s9, 0
    %p97 = por %p95, %p96
    %p98 = scmp.ne.s32.totalorder %s87, %s90
    %p99 = scmp.eq.s32.totalorder %s14, 1
    %p100 = por %p98, %p99
    %p101 = scmp.ne.s32.totalorder %s90, %s91
    %p102 = scmp.eq.s32.totalorder %s14, 0
    %p103 = por %p101, %p102
    %p104 = scmp.ne.s32.totalorder %s90, %s91
    %p105 = scmp.eq.s32.totalorder %s15, 1
    %p106 = por %p104, %p105
    %p108 = scmp.ne.s32.totalorder %s91, %s107
    %p109 = scmp.eq.s32.totalorder %s15, 0
    %p110 = por %p108, %p109
    %p111 = scmp.le.s32.totalorder 1, %s9
    %p112 = scmp.lt.s32.totalorder %s9, 3
    %p113 = pnand %p111, %p112
    %p114 = pneg %p113
    // Predicated region
    $region9: #{tpu_custom_call.1} parent=5 // pred_check
      _
    $region10: #{tpu_custom_call.1} parent=5 // pred_check_branch
      %116 = sbr.rel (%p113) target = $region12
    $region11: #{tpu_custom_call.1} parent=5 // pred_region
      %s117 = ssub.s32 %s9, 1
      // Predicated region
      $region13: #{tpu_custom_call.1} parent=11 // pred_check
        %p118 = pneg %p56
      $region14: #{tpu_custom_call.1} parent=11 // pred_check_branch
        %120 = sbr.rel (%p118) target = $region16
      $region15: #{tpu_custom_call.1} parent=11 // pred_region
        _
      $region16: #{tpu_custom_call.1} parent=11 // pred_fallthru
        _
      // Predicated region
      $region17: #{tpu_custom_call.1} parent=11 // pred_check
        %p121 = pneg %p77
      $region18: #{tpu_custom_call.1} parent=11 // pred_check_branch
        %123 = sbr.rel (%p121) target = $region20
      $region19: #{tpu_custom_call.1} parent=11 // pred_region
        _
      $region20: #{tpu_custom_call.1} parent=11 // pred_fallthru
        _
    $region12: #{tpu_custom_call.1} parent=5 // pred_fallthru
      _
    %p124 = scmp.lt.s32.totalorder %s9, 2
    // Predicated region
    $region21: #{tpu_custom_call.1} parent=5 // pred_check
      %p125 = pneg %p124
    $region22: #{tpu_custom_call.1} parent=5 // pred_check_branch
      %127 = sbr.rel (%p125) target = $region24
    $region23: #{tpu_custom_call.1} parent=5 // pred_region
      // Predicated region
      $region25: #{tpu_custom_call.1} parent=23 // pred_check
        %p128 = pneg %p29
      $region26: #{tpu_custom_call.1} parent=23 // pred_check_branch
        %130 = sbr.rel (%p128) target = $region28
      $region27: #{tpu_custom_call.1} parent=23 // pred_region
        %p131 = scmp.lt.s32.totalorder %s9, 1
        %s132 = scalar_select %p131, %s9, 1
        %s133 = smul.addr %s132, 128
        %s134 = smul.addr %s133, 4
        %s135 = scalar_lea.vmem %s0, %s134
      $region28: #{tpu_custom_call.1} parent=23 // pred_fallthru
        _
    $region24: #{tpu_custom_call.1} parent=5 // pred_fallthru
      _
    %p136 = scmp.le.s32.totalorder 1, %s9
    %p137 = scmp.lt.s32.totalorder %s9, 3
    %p138 = pnand %p136, %p137
    %p139 = pneg %p138
    // Predicated region
    $region29: #{tpu_custom_call.1} parent=5 // pred_check
      _
    $region30: #{tpu_custom_call.1} parent=5 // pred_check_branch
      %141 = sbr.rel (%p138) target = $region32
    $region31: #{tpu_custom_call.1} parent=5 // pred_region
      %s142 = ssub.s32 %s9, 1
      %p143 = scmp.lt.s32.totalorder %s14, 1
      %s144 = scalar_select %p143, %s14, 1
      %s145 = smul.addr %s144, 128
      %s146 = smul.addr %s145, 4
      %s147 = scalar_lea.vmem %s0, %s146
      %p148 = pneg %p35
      %p149 = pneg %p32
      %p150 = pneg %p56
      %p151 = pneg %p53
      %p152 = pneg %p77
      %p153 = pneg %p74
      %p154 = pneg %p103
      %p155 = pneg %p100
      %p156 = scmp.lt.s32.totalorder %s14, 1
      %s157 = scalar_select %p156, %s14, 1
      %s158 = smul.addr %s157, 128
      %s159 = smul.addr %s158, 8
      %s160 = scalar_lea.vmem %s3, %s159
      %p161 = scmp.lt.s32.totalorder %s14, 1
      %s162 = scalar_select %p161, %s14, 1
      %s163 = smul.addr %s162, 128
      %s164 = smul.addr %s163, 4
      %s165 = scalar_lea.vmem %s0, %s164
      %p166 = scmp.lt.s32.totalorder %s14, 1
      %s167 = scalar_select %p166, %s14, 1
      %s168 = smul.addr %s167, 128
      %s169 = smul.addr %s168, 8
      %s170 = scalar_lea.vmem %s3, %s169
      %v172 = vld [vmem:[%s165] sm:$0xf]
      %v173 = vld [vmem:[%s165 + $0x4] sm:$0xf]
      %v174 = vld [vmem:[%s165 + $0x8] sm:$0xf]
      %v175 = vld [vmem:[%s165 + $0xc] sm:$0xf]
      %v176 = vld [vmem:[%s165 + $0x10] sm:$0xf]
      %v177 = vld [vmem:[%s165 + $0x14] sm:$0xf]
      %v178 = vld [vmem:[%s165 + $0x18] sm:$0xf]
      %v179 = vld [vmem:[%s165 + $0x1c] sm:$0xf]
      %v180 = vld [vmem:[%s165 + $0x20] sm:$0xf]
      %v181 = vld [vmem:[%s165 + $0x24] sm:$0xf]
      %v182 = vld [vmem:[%s165 + $0x28] sm:$0xf]
      %v183 = vld [vmem:[%s165 + $0x2c] sm:$0xf]
      %v184 = vld [vmem:[%s165 + $0x30] sm:$0xf]
      %v185 = vld [vmem:[%s165 + $0x34] sm:$0xf]
      %v186 = vld [vmem:[%s165 + $0x38] sm:$0xf]
      %v187 = vld [vmem:[%s165 + $0x3c] sm:$0xf]
      %v188 = vld [vmem:[%s165 + $0x40] sm:$0xf]
      %v189 = vld [vmem:[%s165 + $0x44] sm:$0xf]
      %v190 = vld [vmem:[%s165 + $0x48] sm:$0xf]
      %v191 = vld [vmem:[%s165 + $0x4c] sm:$0xf]
      %v192 = vld [vmem:[%s165 + $0x50] sm:$0xf]
      %v193 = vld [vmem:[%s165 + $0x54] sm:$0xf]
      %v194 = vld [vmem:[%s165 + $0x58] sm:$0xf]
      %v195 = vld [vmem:[%s165 + $0x5c] sm:$0xf]
      %v196 = vld [vmem:[%s165 + $0x60] sm:$0xf]
      %v197 = vld [vmem:[%s165 + $0x64] sm:$0xf]
      %v198 = vld [vmem:[%s165 + $0x68] sm:$0xf]
      %v199 = vld [vmem:[%s165 + $0x6c] sm:$0xf]
      %v200 = vld [vmem:[%s165 + $0x70] sm:$0xf]
      %v201 = vld [vmem:[%s165 + $0x74] sm:$0xf]
      %v202 = vld [vmem:[%s165 + $0x78] sm:$0xf]
      %v203 = vld [vmem:[%s165 + $0x7c] sm:$0xf]
      %v204 = vld [vmem:[%s165 + $0x80] sm:$0xf]
      %v205 = vld [vmem:[%s165 + $0x84] sm:$0xf]
      %v206 = vld [vmem:[%s165 + $0x88] sm:$0xf]
      %v207 = vld [vmem:[%s165 + $0x8c] sm:$0xf]
      %v208 = vld [vmem:[%s165 + $0x90] sm:$0xf]
      %v209 = vld [vmem:[%s165 + $0x94] sm:$0xf]
      %v210 = vld [vmem:[%s165 + $0x98] sm:$0xf]
      %v211 = vld [vmem:[%s165 + $0x9c] sm:$0xf]
      %v212 = vld [vmem:[%s165 + $0xa0] sm:$0xf]
      %v213 = vld [vmem:[%s165 + $0xa4] sm:$0xf]
      %v214 = vld [vmem:[%s165 + $0xa8] sm:$0xf]
      %v215 = vld [vmem:[%s165 + $0xac] sm:$0xf]
      %v216 = vld [vmem:[%s165 + $0xb0] sm:$0xf]
      %v217 = vld [vmem:[%s165 + $0xb4] sm:$0xf]
      %v218 = vld [vmem:[%s165 + $0xb8] sm:$0xf]
      %v219 = vld [vmem:[%s165 + $0xbc] sm:$0xf]
      %v220 = vld [vmem:[%s165 + $0xc0] sm:$0xf]
      %v221 = vld [vmem:[%s165 + $0xc4] sm:$0xf]
      %v222 = vld [vmem:[%s165 + $0xc8] sm:$0xf]
      %v223 = vld [vmem:[%s165 + $0xcc] sm:$0xf]
      %v224 = vld [vmem:[%s165 + $0xd0] sm:$0xf]
      %v225 = vld [vmem:[%s165 + $0xd4] sm:$0xf]
      %v226 = vld [vmem:[%s165 + $0xd8] sm:$0xf]
      %v227 = vld [vmem:[%s165 + $0xdc] sm:$0xf]
      %v228 = vld [vmem:[%s165 + $0xe0] sm:$0xf]
      %v229 = vld [vmem:[%s165 + $0xe4] sm:$0xf]
      %v230 = vld [vmem:[%s165 + $0xe8] sm:$0xf]
      %v231 = vld [vmem:[%s165 + $0xec] sm:$0xf]
      %v232 = vld [vmem:[%s165 + $0xf0] sm:$0xf]
      %v233 = vld [vmem:[%s165 + $0xf4] sm:$0xf]
      %v234 = vld [vmem:[%s165 + $0xf8] sm:$0xf]
      %v235 = vld [vmem:[%s165 + $0xfc] sm:$0xf]
      %v236 = vld [vmem:[%s165 + $0x100] sm:$0xf]
      %v237 = vld [vmem:[%s165 + $0x104] sm:$0xf]
      %v238 = vld [vmem:[%s165 + $0x108] sm:$0xf]
      %v239 = vld [vmem:[%s165 + $0x10c] sm:$0xf]
      %v240 = vld [vmem:[%s165 + $0x110] sm:$0xf]
      %v241 = vld [vmem:[%s165 + $0x114] sm:$0xf]
      %v242 = vld [vmem:[%s165 + $0x118] sm:$0xf]
      %v243 = vld [vmem:[%s165 + $0x11c] sm:$0xf]
      %v244 = vld [vmem:[%s165 + $0x120] sm:$0xf]
      %v245 = vld [vmem:[%s165 + $0x124] sm:$0xf]
      %v246 = vld [vmem:[%s165 + $0x128] sm:$0xf]
      %v247 = vld [vmem:[%s165 + $0x12c] sm:$0xf]
      %v248 = vld [vmem:[%s165 + $0x130] sm:$0xf]
      %v249 = vld [vmem:[%s165 + $0x134] sm:$0xf]
      %v250 = vld [vmem:[%s165 + $0x138] sm:$0xf]
      %v251 = vld [vmem:[%s165 + $0x13c] sm:$0xf]
      %v252 = vld [vmem:[%s165 + $0x140] sm:$0xf]
      %v253 = vld [vmem:[%s165 + $0x144] sm:$0xf]
      %v254 = vld [vmem:[%s165 + $0x148] sm:$0xf]
      %v255 = vld [vmem:[%s165 + $0x14c] sm:$0xf]
      %v256 = vld [vmem:[%s165 + $0x150] sm:$0xf]
      %v257 = vld [vmem:[%s165 + $0x154] sm:$0xf]
      %v258 = vld [vmem:[%s165 + $0x158] sm:$0xf]
      %v259 = vld [vmem:[%s165 + $0x15c] sm:$0xf]
      %v260 = vld [vmem:[%s165 + $0x160] sm:$0xf]
      %v261 = vld [vmem:[%s165 + $0x164] sm:$0xf]
      %v262 = vld [vmem:[%s165 + $0x168] sm:$0xf]
      %v263 = vld [vmem:[%s165 + $0x16c] sm:$0xf]
      %v264 = vld [vmem:[%s165 + $0x170] sm:$0xf]
      %v265 = vld [vmem:[%s165 + $0x174] sm:$0xf]
      %v266 = vld [vmem:[%s165 + $0x178] sm:$0xf]
      %v267 = vld [vmem:[%s165 + $0x17c] sm:$0xf]
      %v268 = vld [vmem:[%s165 + $0x180] sm:$0xf]
      %v269 = vld [vmem:[%s165 + $0x184] sm:$0xf]
      %v270 = vld [vmem:[%s165 + $0x188] sm:$0xf]
      %v271 = vld [vmem:[%s165 + $0x18c] sm:$0xf]
      %v272 = vld [vmem:[%s165 + $0x190] sm:$0xf]
      %v273 = vld [vmem:[%s165 + $0x194] sm:$0xf]
      %v274 = vld [vmem:[%s165 + $0x198] sm:$0xf]
      %v275 = vld [vmem:[%s165 + $0x19c] sm:$0xf]
      %v276 = vld [vmem:[%s165 + $0x1a0] sm:$0xf]
      %v277 = vld [vmem:[%s165 + $0x1a4] sm:$0xf]
      %v278 = vld [vmem:[%s165 + $0x1a8] sm:$0xf]
      %v279 = vld [vmem:[%s165 + $0x1ac] sm:$0xf]
      %v280 = vld [vmem:[%s165 + $0x1b0] sm:$0xf]
      %v281 = vld [vmem:[%s165 + $0x1b4] sm:$0xf]
      %v282 = vld [vmem:[%s165 + $0x1b8] sm:$0xf]
      %v283 = vld [vmem:[%s165 + $0x1bc] sm:$0xf]
      %v284 = vld [vmem:[%s165 + $0x1c0] sm:$0xf]
      %v285 = vld [vmem:[%s165 + $0x1c4] sm:$0xf]
      %v286 = vld [vmem:[%s165 + $0x1c8] sm:$0xf]
      %v287 = vld [vmem:[%s165 + $0x1cc] sm:$0xf]
      %v288 = vld [vmem:[%s165 + $0x1d0] sm:$0xf]
      %v289 = vld [vmem:[%s165 + $0x1d4] sm:$0xf]
      %v290 = vld [vmem:[%s165 + $0x1d8] sm:$0xf]
      %v291 = vld [vmem:[%s165 + $0x1dc] sm:$0xf]
      %v292 = vld [vmem:[%s165 + $0x1e0] sm:$0xf]
      %v293 = vld [vmem:[%s165 + $0x1e4] sm:$0xf]
      %v294 = vld [vmem:[%s165 + $0x1e8] sm:$0xf]
      %v295 = vld [vmem:[%s165 + $0x1ec] sm:$0xf]
      %v296 = vld [vmem:[%s165 + $0x1f0] sm:$0xf]
      %v297 = vld [vmem:[%s165 + $0x1f4] sm:$0xf]
      %v298 = vld [vmem:[%s165 + $0x1f8] sm:$0xf]
      %v299 = vld [vmem:[%s165 + $0x1fc] sm:$0xf]
      %v300 = vld [vmem:[%s1] sm:$0xf]
      %v301 = vld [vmem:[%s1 + $0x4] sm:$0xf]
      %v302 = vld [vmem:[%s1 + $0x8] sm:$0xf]
      %v303 = vld [vmem:[%s1 + $0xc] sm:$0xf]
      %v304 = vld [vmem:[%s1 + $0x10] sm:$0xf]
      %v305 = vld [vmem:[%s1 + $0x14] sm:$0xf]
      %v306 = vld [vmem:[%s2] sm:$0x1]
      %v308 = vlaneseq
      %v309 = vshrl.u32 %v308, 7
      %v310 = vsub.s32 0, %v309
      %v311 = vrot.slane %v306, %v310
      %v441 = vunpack.c.l.b16 %v172
      %v442 = vunpack.c.l.b16 %v173
      %v443 = vunpack.c.l.b16 %v174
      %v444 = vunpack.c.l.b16 %v175
      %v445 = vunpack.c.l.b16 %v176
      %v446 = vunpack.c.l.b16 %v177
      %v447 = vunpack.c.l.b16 %v178
      %v448 = vunpack.c.l.b16 %v179
      %v449 = vunpack.c.l.b16 %v180
      %v450 = vunpack.c.l.b16 %v181
      %v451 = vunpack.c.l.b16 %v182
      %v452 = vunpack.c.l.b16 %v183
      %v453 = vunpack.c.l.b16 %v184
      %v454 = vunpack.c.l.b16 %v185
      %v455 = vunpack.c.l.b16 %v186
      %v456 = vunpack.c.l.b16 %v187
      %v457 = vunpack.c.l.b16 %v188
      %v458 = vunpack.c.l.b16 %v189
      %v459 = vunpack.c.l.b16 %v190
      %v460 = vunpack.c.l.b16 %v191
      %v461 = vunpack.c.l.b16 %v192
      %v462 = vunpack.c.l.b16 %v193
      %v463 = vunpack.c.l.b16 %v194
      %v464 = vunpack.c.l.b16 %v195
      %v465 = vunpack.c.l.b16 %v196
      %v466 = vunpack.c.l.b16 %v197
      %v467 = vunpack.c.l.b16 %v198
      %v468 = vunpack.c.l.b16 %v199
      %v469 = vunpack.c.l.b16 %v200
      %v470 = vunpack.c.l.b16 %v201
      %v471 = vunpack.c.l.b16 %v202
      %v472 = vunpack.c.l.b16 %v203
      %v473 = vunpack.c.l.b16 %v204
      %v474 = vunpack.c.l.b16 %v205
      %v475 = vunpack.c.l.b16 %v206
      %v476 = vunpack.c.l.b16 %v207
      %v477 = vunpack.c.l.b16 %v208
      %v478 = vunpack.c.l.b16 %v209
      %v479 = vunpack.c.l.b16 %v210
      %v480 = vunpack.c.l.b16 %v211
      %v481 = vunpack.c.l.b16 %v212
      %v482 = vunpack.c.l.b16 %v213
      %v483 = vunpack.c.l.b16 %v214
      %v484 = vunpack.c.l.b16 %v215
      %v485 = vunpack.c.l.b16 %v216
      %v486 = vunpack.c.l.b16 %v217
      %v487 = vunpack.c.l.b16 %v218
      %v488 = vunpack.c.l.b16 %v219
      %v489 = vunpack.c.l.b16 %v220
      %v490 = vunpack.c.l.b16 %v221
      %v491 = vunpack.c.l.b16 %v222
      %v492 = vunpack.c.l.b16 %v223
      %v493 = vunpack.c.l.b16 %v224
      %v494 = vunpack.c.l.b16 %v225
      %v495 = vunpack.c.l.b16 %v226
      %v496 = vunpack.c.l.b16 %v227
      %v497 = vunpack.c.l.b16 %v228
      %v498 = vunpack.c.l.b16 %v229
      %v499 = vunpack.c.l.b16 %v230
      %v500 = vunpack.c.l.b16 %v231
      %v501 = vunpack.c.l.b16 %v232
      %v502 = vunpack.c.l.b16 %v233
      %v503 = vunpack.c.l.b16 %v234
      %v504 = vunpack.c.l.b16 %v235
      %v505 = vunpack.c.l.b16 %v236
      %v506 = vunpack.c.l.b16 %v237
      %v507 = vunpack.c.l.b16 %v238
      %v508 = vunpack.c.l.b16 %v239
      %v509 = vunpack.c.l.b16 %v240
      %v510 = vunpack.c.l.b16 %v241
      %v511 = vunpack.c.l.b16 %v242
      %v512 = vunpack.c.l.b16 %v243
      %v513 = vunpack.c.l.b16 %v244
      %v514 = vunpack.c.l.b16 %v245
      %v515 = vunpack.c.l.b16 %v246
      %v516 = vunpack.c.l.b16 %v247
      %v517 = vunpack.c.l.b16 %v248
      %v518 = vunpack.c.l.b16 %v249
      %v519 = vunpack.c.l.b16 %v250
      %v520 = vunpack.c.l.b16 %v251
      %v521 = vunpack.c.l.b16 %v252
      %v522 = vunpack.c.l.b16 %v253
      %v523 = vunpack.c.l.b16 %v254
      %v524 = vunpack.c.l.b16 %v255
      %v525 = vunpack.c.l.b16 %v256
      %v526 = vunpack.c.l.b16 %v257
      %v527 = vunpack.c.l.b16 %v258
      %v528 = vunpack.c.l.b16 %v259
      %v529 = vunpack.c.l.b16 %v260
      %v530 = vunpack.c.l.b16 %v261
      %v531 = vunpack.c.l.b16 %v262
      %v532 = vunpack.c.l.b16 %v263
      %v533 = vunpack.c.l.b16 %v264
      %v534 = vunpack.c.l.b16 %v265
      %v535 = vunpack.c.l.b16 %v266
      %v536 = vunpack.c.l.b16 %v267
      %v537 = vunpack.c.l.b16 %v268
      %v538 = vunpack.c.l.b16 %v269
      %v539 = vunpack.c.l.b16 %v270
      %v540 = vunpack.c.l.b16 %v271
      %v541 = vunpack.c.l.b16 %v272
      %v542 = vunpack.c.l.b16 %v273
      %v543 = vunpack.c.l.b16 %v274
      %v544 = vunpack.c.l.b16 %v275
      %v545 = vunpack.c.l.b16 %v276
      %v546 = vunpack.c.l.b16 %v277
      %v547 = vunpack.c.l.b16 %v278
      %v548 = vunpack.c.l.b16 %v279
      %v549 = vunpack.c.l.b16 %v280
      %v550 = vunpack.c.l.b16 %v281
      %v551 = vunpack.c.l.b16 %v282
      %v552 = vunpack.c.l.b16 %v283
      %v553 = vunpack.c.l.b16 %v284
      %v554 = vunpack.c.l.b16 %v285
      %v555 = vunpack.c.l.b16 %v286
      %v556 = vunpack.c.l.b16 %v287
      %v557 = vunpack.c.l.b16 %v288
      %v558 = vunpack.c.l.b16 %v289
      %v559 = vunpack.c.l.b16 %v290
      %v560 = vunpack.c.l.b16 %v291
      %v561 = vunpack.c.l.b16 %v292
      %v562 = vunpack.c.l.b16 %v293
      %v563 = vunpack.c.l.b16 %v294
      %v564 = vunpack.c.l.b16 %v295
      %v565 = vunpack.c.l.b16 %v296
      %v566 = vunpack.c.l.b16 %v297
      %v567 = vunpack.c.l.b16 %v298
      %v568 = vunpack.c.l.b16 %v299
      %v569 = vpack.c.b16 %v442, %v441
      %v570 = vpack.c.b16 %v444, %v443
      %v571 = vpack.c.b16 %v446, %v445
      %v572 = vpack.c.b16 %v448, %v447
      %v573 = vpack.c.b16 %v450, %v449
      %v574 = vpack.c.b16 %v452, %v451
      %v575 = vpack.c.b16 %v454, %v453
      %v576 = vpack.c.b16 %v456, %v455
      %v577 = vpack.c.b16 %v458, %v457
      %v578 = vpack.c.b16 %v460, %v459
      %v579 = vpack.c.b16 %v462, %v461
      %v580 = vpack.c.b16 %v464, %v463
      %v581 = vpack.c.b16 %v466, %v465
      %v582 = vpack.c.b16 %v468, %v467
      %v583 = vpack.c.b16 %v470, %v469
      %v584 = vpack.c.b16 %v472, %v471
      %v585 = vpack.c.b16 %v474, %v473
      %v586 = vpack.c.b16 %v476, %v475
      %v587 = vpack.c.b16 %v478, %v477
      %v588 = vpack.c.b16 %v480, %v479
      %v589 = vpack.c.b16 %v482, %v481
      %v590 = vpack.c.b16 %v484, %v483
      %v591 = vpack.c.b16 %v486, %v485
      %v592 = vpack.c.b16 %v488, %v487
      %v593 = vpack.c.b16 %v490, %v489
      %v594 = vpack.c.b16 %v492, %v491
      %v595 = vpack.c.b16 %v494, %v493
      %v596 = vpack.c.b16 %v496, %v495
      %v597 = vpack.c.b16 %v498, %v497
      %v598 = vpack.c.b16 %v500, %v499
      %v599 = vpack.c.b16 %v502, %v501
      %v600 = vpack.c.b16 %v504, %v503
      %v601 = vpack.c.b16 %v506, %v505
      %v602 = vpack.c.b16 %v508, %v507
      %v603 = vpack.c.b16 %v510, %v509
      %v604 = vpack.c.b16 %v512, %v511
      %v605 = vpack.c.b16 %v514, %v513
      %v606 = vpack.c.b16 %v516, %v515
      %v607 = vpack.c.b16 %v518, %v517
      %v608 = vpack.c.b16 %v520, %v519
      %v609 = vpack.c.b16 %v522, %v521
      %v610 = vpack.c.b16 %v524, %v523
      %v611 = vpack.c.b16 %v526, %v525
      %v612 = vpack.c.b16 %v528, %v527
      %v613 = vpack.c.b16 %v530, %v529
      %v614 = vpack.c.b16 %v532, %v531
      %v615 = vpack.c.b16 %v534, %v533
      %v616 = vpack.c.b16 %v536, %v535
      %v617 = vpack.c.b16 %v538, %v537
      %v618 = vpack.c.b16 %v540, %v539
      %v619 = vpack.c.b16 %v542, %v541
      %v620 = vpack.c.b16 %v544, %v543
      %v621 = vpack.c.b16 %v546, %v545
      %v622 = vpack.c.b16 %v548, %v547
      %v623 = vpack.c.b16 %v550, %v549
      %v624 = vpack.c.b16 %v552, %v551
      %v625 = vpack.c.b16 %v554, %v553
      %v626 = vpack.c.b16 %v556, %v555
      %v627 = vpack.c.b16 %v558, %v557
      %v628 = vpack.c.b16 %v560, %v559
      %v629 = vpack.c.b16 %v562, %v561
      %v630 = vpack.c.b16 %v564, %v563
      %v631 = vpack.c.b16 %v566, %v565
      %v632 = vpack.c.b16 %v568, %v567
      %v639 = vunpack.c.l.b16 %v300
      %v640 = vunpack.c.l.b16 %v301
      %v641 = vunpack.c.l.b16 %v302
      %v642 = vunpack.c.l.b16 %v303
      %v643 = vunpack.c.l.b16 %v304
      %v644 = vunpack.c.l.b16 %v305
      %v645 = vpack.c.b16 %v640, %v639
      %v646 = vpack.c.b16 %v642, %v641
      %v647 = vpack.c.b16 %v644, %v643
      %vm651 = vcmask 392192
      %v653 = vsel %vm651, %v569, 0
      %v656 = vsel %vm651, %v570, 0
      %v659 = vsel %vm651, %v571, 0
      %v662 = vsel %vm651, %v572, 0
      %v665 = vsel %vm651, %v573, 0
      %v668 = vsel %vm651, %v574, 0
      %v671 = vsel %vm651, %v575, 0
      %v674 = vsel %vm651, %v576, 0
      %v677 = vsel %vm651, %v577, 0
      %v680 = vsel %vm651, %v578, 0
      %v683 = vsel %vm651, %v579, 0
      %v686 = vsel %vm651, %v580, 0
      %v689 = vsel %vm651, %v581, 0
      %v692 = vsel %vm651, %v582, 0
      %v695 = vsel %vm651, %v583, 0
      %v698 = vsel %vm651, %v584, 0
      %v701 = vsel %vm651, %v585, 0
      %v704 = vsel %vm651, %v586, 0
      %v707 = vsel %vm651, %v587, 0
      %v710 = vsel %vm651, %v588, 0
      %v713 = vsel %vm651, %v589, 0
      %v716 = vsel %vm651, %v590, 0
      %v719 = vsel %vm651, %v591, 0
      %v722 = vsel %vm651, %v592, 0
      %v725 = vsel %vm651, %v593, 0
      %v728 = vsel %vm651, %v594, 0
      %v731 = vsel %vm651, %v595, 0
      %v734 = vsel %vm651, %v596, 0
      %v737 = vsel %vm651, %v597, 0
      %v740 = vsel %vm651, %v598, 0
      %v743 = vsel %vm651, %v599, 0
      %v746 = vsel %vm651, %v600, 0
      %v749 = vsel %vm651, %v601, 0
      %v752 = vsel %vm651, %v602, 0
      %v755 = vsel %vm651, %v603, 0
      %v758 = vsel %vm651, %v604, 0
      %v761 = vsel %vm651, %v605, 0
      %v764 = vsel %vm651, %v606, 0
      %v767 = vsel %vm651, %v607, 0
      %v770 = vsel %vm651, %v608, 0
      %v773 = vsel %vm651, %v609, 0
      %v776 = vsel %vm651, %v610, 0
      %v779 = vsel %vm651, %v611, 0
      %v782 = vsel %vm651, %v612, 0
      %v785 = vsel %vm651, %v613, 0
      %v788 = vsel %vm651, %v614, 0
      %v791 = vsel %vm651, %v615, 0
      %v794 = vsel %vm651, %v616, 0
      %v797 = vsel %vm651, %v617, 0
      %v800 = vsel %vm651, %v618, 0
      %v803 = vsel %vm651, %v619, 0
      %v806 = vsel %vm651, %v620, 0
      %v809 = vsel %vm651, %v621, 0
      %v812 = vsel %vm651, %v622, 0
      %v815 = vsel %vm651, %v623, 0
      %v818 = vsel %vm651, %v624, 0
      %v821 = vsel %vm651, %v625, 0
      %v824 = vsel %vm651, %v626, 0
      %v827 = vsel %vm651, %v627, 0
      %v830 = vsel %vm651, %v628, 0
      %v833 = vsel %vm651, %v629, 0
      %v836 = vsel %vm651, %v630, 0
      %v839 = vsel %vm651, %v631, 0
      %v842 = vsel %vm651, %v632, 0
      %844 = vmatprep.subr.bf16.mxu0 0
      %845 = vmatpush1.bf16.msra.mxu0 0
      %846 = vmatprep.subr.bf16.mxu0 0
      %847 = vmatpush1.bf16.msra.mxu0 0
      %848 = vmatprep.subr.bf16.mxu0 0
      %849 = vmatpush1.bf16.msra.mxu0 0
      %850 = vmatprep.subr.bf16.mxu0 0
      %851 = vmatpush1.bf16.msra.mxu0 0
      %852 = vmatprep.subr.bf16.mxu0 0
      %853 = vmatpush1.bf16.msra.mxu0 0
      %854 = vmatprep.subr.bf16.mxu0 0
      %855 = vmatpush1.bf16.msra.mxu0 %v647
      %856 = vmatprep.subr.bf16.mxu0 0
      %857 = vmatpush1.bf16.msra.mxu0 %v646
      %858 = vmatprep.subr.bf16.mxu0 0
      %859 = vmatpush1.bf16.msra.mxu0 %v645
      %860 = vmatprep.subr.bf16.mxu0 0
      %861 = vmatpush2.bf16.msra.mxu0 0
      %862 = vmatprep.subr.bf16.mxu0 0
      %863 = vmatpush2.bf16.msra.mxu0 0
      %864 = vmatprep.subr.bf16.mxu0 0
      %865 = vmatpush2.bf16.msra.mxu0 0
      %866 = vmatprep.subr.bf16.mxu0 0
      %867 = vmatpush2.bf16.msra.mxu0 0
      %868 = vmatprep.subr.bf16.mxu0 0
      %869 = vmatpush2.bf16.msra.mxu0 0
      %870 = vmatprep.subr.bf16.mxu0 0
      %871 = vmatpush2.bf16.msra.mxu0 0
      %872 = vmatprep.subr.bf16.mxu0 0
      %873 = vmatpush2.bf16.msra.mxu0 0
      %874 = vmatprep.subr.bf16.mxu0 0
      %875 = vmatpush2.bf16.msra.mxu0 0
      %876 = vmatprep.mubr.bf16.mxu0 0
      %877 = vmatmul.mubr.bf16.gmra.mxu0 %v653
      %v878 = vpop.f32.mrf.mxu0
      %v879 = vadd.f32 %v311, %v878
      %v880 = vpop.f32.mrf.mxu0
      %v881 = vpop.f32.mrf.mxu0
      %v882 = vadd.f32 %v311, %v881
      %v883 = vpop.f32.mrf.mxu0
      %884 = vmatprep.mubr.bf16.mxu0 0
      %885 = vmatmul.mubr.bf16.gmra.mxu0 %v656
      %v886 = vpop.f32.mrf.mxu0
      %v887 = vadd.f32 %v311, %v886
      %v888 = vpop.f32.mrf.mxu0
      %v889 = vpop.f32.mrf.mxu0
      %v890 = vadd.f32 %v311, %v889
      %v891 = vpop.f32.mrf.mxu0
      %892 = vmatprep.mubr.bf16.mxu0 0
      %893 = vmatmul.mubr.bf16.gmra.mxu0 %v659
      %v894 = vpop.f32.mrf.mxu0
      %v895 = vadd.f32 %v311, %v894
      %v896 = vpop.f32.mrf.mxu0
      %v897 = vpop.f32.mrf.mxu0
      %v898 = vadd.f32 %v311, %v897
      %v899 = vpop.f32.mrf.mxu0
      %900 = vmatprep.mubr.bf16.mxu0 0
      %901 = vmatmul.mubr.bf16.gmra.mxu0 %v662
      %v902 = vpop.f32.mrf.mxu0
      %v903 = vadd.f32 %v311, %v902
      %v904 = vpop.f32.mrf.mxu0
      %v905 = vpop.f32.mrf.mxu0
      %v906 = vadd.f32 %v311, %v905
      %v907 = vpop.f32.mrf.mxu0
      %908 = vmatprep.mubr.bf16.mxu0 0
      %909 = vmatmul.mubr.bf16.gmra.mxu0 %v665
      %v910 = vpop.f32.mrf.mxu0
      %v911 = vadd.f32 %v311, %v910
      %v912 = vpop.f32.mrf.mxu0
      %v913 = vpop.f32.mrf.mxu0
      %v914 = vadd.f32 %v311, %v913
      %v915 = vpop.f32.mrf.mxu0
      %916 = vmatprep.mubr.bf16.mxu0 0
      %917 = vmatmul.mubr.bf16.gmra.mxu0 %v668
      %v918 = vpop.f32.mrf.mxu0
      %v919 = vadd.f32 %v311, %v918
      %v920 = vpop.f32.mrf.mxu0
      %v921 = vpop.f32.mrf.mxu0
      %v922 = vadd.f32 %v311, %v921
      %v923 = vpop.f32.mrf.mxu0
      %924 = vmatprep.mubr.bf16.mxu0 0
      %925 = vmatmul.mubr.bf16.gmra.mxu0 %v671
      %v926 = vpop.f32.mrf.mxu0
      %v927 = vadd.f32 %v311, %v926
      %v928 = vpop.f32.mrf.mxu0
      %v929 = vpop.f32.mrf.mxu0
      %v930 = vadd.f32 %v311, %v929
      %v931 = vpop.f32.mrf.mxu0
      %932 = vmatprep.mubr.bf16.mxu0 0
      %933 = vmatmul.mubr.bf16.gmra.mxu0 %v674
      %v934 = vpop.f32.mrf.mxu0
      %v935 = vadd.f32 %v311, %v934
      %v936 = vpop.f32.mrf.mxu0
      %v937 = vpop.f32.mrf.mxu0
      %v938 = vadd.f32 %v311, %v937
      %v939 = vpop.f32.mrf.mxu0
      %940 = vmatprep.mubr.bf16.mxu0 0
      %941 = vmatmul.mubr.bf16.gmra.mxu0 %v677
      %v942 = vpop.f32.mrf.mxu0
      %v943 = vadd.f32 %v311, %v942
      %v944 = vpop.f32.mrf.mxu0
      %v945 = vpop.f32.mrf.mxu0
      %v946 = vadd.f32 %v311, %v945
      %v947 = vpop.f32.mrf.mxu0
      %948 = vmatprep.mubr.bf16.mxu0 0
      %949 = vmatmul.mubr.bf16.gmra.mxu0 %v680
      %v950 = vpop.f32.mrf.mxu0
      %v951 = vadd.f32 %v311, %v950
      %v952 = vpop.f32.mrf.mxu0
      %v953 = vpop.f32.mrf.mxu0
      %v954 = vadd.f32 %v311, %v953
      %v955 = vpop.f32.mrf.mxu0
      %956 = vmatprep.mubr.bf16.mxu0 0
      %957 = vmatmul.mubr.bf16.gmra.mxu0 %v683
      %v958 = vpop.f32.mrf.mxu0
      %v959 = vadd.f32 %v311, %v958
      %v960 = vpop.f32.mrf.mxu0
      %v961 = vpop.f32.mrf.mxu0
      %v962 = vadd.f32 %v311, %v961
      %v963 = vpop.f32.mrf.mxu0
      %964 = vmatprep.mubr.bf16.mxu0 0
      %965 = vmatmul.mubr.bf16.gmra.mxu0 %v686
      %v966 = vpop.f32.mrf.mxu0
      %v967 = vadd.f32 %v311, %v966
      %v968 = vpop.f32.mrf.mxu0
      %v969 = vpop.f32.mrf.mxu0
      %v970 = vadd.f32 %v311, %v969
      %v971 = vpop.f32.mrf.mxu0
      %972 = vmatprep.mubr.bf16.mxu0 0
      %973 = vmatmul.mubr.bf16.gmra.mxu0 %v689
      %v974 = vpop.f32.mrf.mxu0
      %v975 = vadd.f32 %v311, %v974
      %v976 = vpop.f32.mrf.mxu0
      %v977 = vpop.f32.mrf.mxu0
      %v978 = vadd.f32 %v311, %v977
      %v979 = vpop.f32.mrf.mxu0
      %980 = vmatprep.mubr.bf16.mxu0 0
      %981 = vmatmul.mubr.bf16.gmra.mxu0 %v692
      %v982 = vpop.f32.mrf.mxu0
      %v983 = vadd.f32 %v311, %v982
      %v984 = vpop.f32.mrf.mxu0
      %v985 = vpop.f32.mrf.mxu0
      %v986 = vadd.f32 %v311, %v985
      %v987 = vpop.f32.mrf.mxu0
      %988 = vmatprep.mubr.bf16.mxu0 0
      %989 = vmatmul.mubr.bf16.gmra.mxu0 %v695
      %v990 = vpop.f32.mrf.mxu0
      %v991 = vadd.f32 %v311, %v990
      %v992 = vpop.f32.mrf.mxu0
      %v993 = vpop.f32.mrf.mxu0
      %v994 = vadd.f32 %v311, %v993
      %v995 = vpop.f32.mrf.mxu0
      %996 = vmatprep.mubr.bf16.mxu0 0
      %997 = vmatmul.mubr.bf16.gmra.mxu0 %v698
      %v998 = vpop.f32.mrf.mxu0
      %v999 = vadd.f32 %v311, %v998
      %v1000 = vpop.f32.mrf.mxu0
      %v1001 = vpop.f32.mrf.mxu0
      %v1002 = vadd.f32 %v311, %v1001
      %v1003 = vpop.f32.mrf.mxu0
      %1004 = vmatprep.mubr.bf16.mxu0 0
      %1005 = vmatmul.mubr.bf16.gmra.mxu0 %v701
      %v1006 = vpop.f32.mrf.mxu0
      %v1007 = vadd.f32 %v311, %v1006
      %v1008 = vpop.f32.mrf.mxu0
      %v1009 = vpop.f32.mrf.mxu0
      %v1010 = vadd.f32 %v311, %v1009
      %v1011 = vpop.f32.mrf.mxu0
      %1012 = vmatprep.mubr.bf16.mxu0 0
      %1013 = vmatmul.mubr.bf16.gmra.mxu0 %v704
      %v1014 = vpop.f32.mrf.mxu0
      %v1015 = vadd.f32 %v311, %v1014
      %v1016 = vpop.f32.mrf.mxu0
      %v1017 = vpop.f32.mrf.mxu0
      %v1018 = vadd.f32 %v311, %v1017
      %v1019 = vpop.f32.mrf.mxu0
      %1020 = vmatprep.mubr.bf16.mxu0 0
      %1021 = vmatmul.mubr.bf16.gmra.mxu0 %v707
      %v1022 = vpop.f32.mrf.mxu0
      %v1023 = vadd.f32 %v311, %v1022
      %v1024 = vpop.f32.mrf.mxu0
      %v1025 = vpop.f32.mrf.mxu0
      %v1026 = vadd.f32 %v311, %v1025
      %v1027 = vpop.f32.mrf.mxu0
      %1028 = vmatprep.mubr.bf16.mxu0 0
      %1029 = vmatmul.mubr.bf16.gmra.mxu0 %v710
      %v1030 = vpop.f32.mrf.mxu0
      %v1031 = vadd.f32 %v311, %v1030
      %v1032 = vpop.f32.mrf.mxu0
      %v1033 = vpop.f32.mrf.mxu0
      %v1034 = vadd.f32 %v311, %v1033
      %v1035 = vpop.f32.mrf.mxu0
      %1036 = vmatprep.mubr.bf16.mxu0 0
      %1037 = vmatmul.mubr.bf16.gmra.mxu0 %v713
      %v1038 = vpop.f32.mrf.mxu0
      %v1039 = vadd.f32 %v311, %v1038
      %v1040 = vpop.f32.mrf.mxu0
      %v1041 = vpop.f32.mrf.mxu0
      %v1042 = vadd.f32 %v311, %v1041
      %v1043 = vpop.f32.mrf.mxu0
      %1044 = vmatprep.mubr.bf16.mxu0 0
      %1045 = vmatmul.mubr.bf16.gmra.mxu0 %v716
      %v1046 = vpop.f32.mrf.mxu0
      %v1047 = vadd.f32 %v311, %v1046
      %v1048 = vpop.f32.mrf.mxu0
      %v1049 = vpop.f32.mrf.mxu0
      %v1050 = vadd.f32 %v311, %v1049
      %v1051 = vpop.f32.mrf.mxu0
      %1052 = vmatprep.mubr.bf16.mxu0 0
      %1053 = vmatmul.mubr.bf16.gmra.mxu0 %v719
      %v1054 = vpop.f32.mrf.mxu0
      %v1055 = vadd.f32 %v311, %v1054
      %v1056 = vpop.f32.mrf.mxu0
      %v1057 = vpop.f32.mrf.mxu0
      %v1058 = vadd.f32 %v311, %v1057
      %v1059 = vpop.f32.mrf.mxu0
      %1060 = vmatprep.mubr.bf16.mxu0 0
      %1061 = vmatmul.mubr.bf16.gmra.mxu0 %v722
      %v1062 = vpop.f32.mrf.mxu0
      %v1063 = vadd.f32 %v311, %v1062
      %v1064 = vpop.f32.mrf.mxu0
      %v1065 = vpop.f32.mrf.mxu0
      %v1066 = vadd.f32 %v311, %v1065
      %v1067 = vpop.f32.mrf.mxu0
      %1068 = vmatprep.mubr.bf16.mxu0 0
      %1069 = vmatmul.mubr.bf16.gmra.mxu0 %v725
      %v1070 = vpop.f32.mrf.mxu0
      %v1071 = vadd.f32 %v311, %v1070
      %v1072 = vpop.f32.mrf.mxu0
      %v1073 = vpop.f32.mrf.mxu0
      %v1074 = vadd.f32 %v311, %v1073
      %v1075 = vpop.f32.mrf.mxu0
      %1076 = vmatprep.mubr.bf16.mxu0 0
      %1077 = vmatmul.mubr.bf16.gmra.mxu0 %v728
      %v1078 = vpop.f32.mrf.mxu0
      %v1079 = vadd.f32 %v311, %v1078
      %v1080 = vpop.f32.mrf.mxu0
      %v1081 = vpop.f32.mrf.mxu0
      %v1082 = vadd.f32 %v311, %v1081
      %v1083 = vpop.f32.mrf.mxu0
      %1084 = vmatprep.mubr.bf16.mxu0 0
      %1085 = vmatmul.mubr.bf16.gmra.mxu0 %v731
      %v1086 = vpop.f32.mrf.mxu0
      %v1087 = vadd.f32 %v311, %v1086
      %v1088 = vpop.f32.mrf.mxu0
      %v1089 = vpop.f32.mrf.mxu0
      %v1090 = vadd.f32 %v311, %v1089
      %v1091 = vpop.f32.mrf.mxu0
      %1092 = vmatprep.mubr.bf16.mxu0 0
      %1093 = vmatmul.mubr.bf16.gmra.mxu0 %v734
      %v1094 = vpop.f32.mrf.mxu0
      %v1095 = vadd.f32 %v311, %v1094
      %v1096 = vpop.f32.mrf.mxu0
      %v1097 = vpop.f32.mrf.mxu0
      %v1098 = vadd.f32 %v311, %v1097
      %v1099 = vpop.f32.mrf.mxu0
      %1100 = vmatprep.mubr.bf16.mxu0 0
      %1101 = vmatmul.mubr.bf16.gmra.mxu0 %v737
      %v1102 = vpop.f32.mrf.mxu0
      %v1103 = vadd.f32 %v311, %v1102
      %v1104 = vpop.f32.mrf.mxu0
      %v1105 = vpop.f32.mrf.mxu0
      %v1106 = vadd.f32 %v311, %v1105
      %v1107 = vpop.f32.mrf.mxu0
      %1108 = vmatprep.mubr.bf16.mxu0 0
      %1109 = vmatmul.mubr.bf16.gmra.mxu0 %v740
      %v1110 = vpop.f32.mrf.mxu0
      %v1111 = vadd.f32 %v311, %v1110
      %v1112 = vpop.f32.mrf.mxu0
      %v1113 = vpop.f32.mrf.mxu0
      %v1114 = vadd.f32 %v311, %v1113
      %v1115 = vpop.f32.mrf.mxu0
      %1116 = vmatprep.mubr.bf16.mxu0 0
      %1117 = vmatmul.mubr.bf16.gmra.mxu0 %v743
      %v1118 = vpop.f32.mrf.mxu0
      %v1119 = vadd.f32 %v311, %v1118
      %v1120 = vpop.f32.mrf.mxu0
      %v1121 = vpop.f32.mrf.mxu0
      %v1122 = vadd.f32 %v311, %v1121
      %v1123 = vpop.f32.mrf.mxu0
      %1124 = vmatprep.mubr.bf16.mxu0 0
      %1125 = vmatmul.mubr.bf16.gmra.mxu0 %v746
      %v1126 = vpop.f32.mrf.mxu0
      %v1127 = vadd.f32 %v311, %v1126
      %v1128 = vpop.f32.mrf.mxu0
      %v1129 = vpop.f32.mrf.mxu0
      %v1130 = vadd.f32 %v311, %v1129
      %v1131 = vpop.f32.mrf.mxu0
      %1132 = vmatprep.mubr.bf16.mxu0 0
      %1133 = vmatmul.mubr.bf16.gmra.mxu0 %v749
      %v1134 = vpop.f32.mrf.mxu0
      %v1135 = vadd.f32 %v311, %v1134
      %v1136 = vpop.f32.mrf.mxu0
      %v1137 = vpop.f32.mrf.mxu0
      %v1138 = vadd.f32 %v311, %v1137
      %v1139 = vpop.f32.mrf.mxu0
      %1140 = vmatprep.mubr.bf16.mxu0 0
      %1141 = vmatmul.mubr.bf16.gmra.mxu0 %v752
      %v1142 = vpop.f32.mrf.mxu0
      %v1143 = vadd.f32 %v311, %v1142
      %v1144 = vpop.f32.mrf.mxu0
      %v1145 = vpop.f32.mrf.mxu0
      %v1146 = vadd.f32 %v311, %v1145
      %v1147 = vpop.f32.mrf.mxu0
      %1148 = vmatprep.mubr.bf16.mxu0 0
      %1149 = vmatmul.mubr.bf16.gmra.mxu0 %v755
      %v1150 = vpop.f32.mrf.mxu0
      %v1151 = vadd.f32 %v311, %v1150
      %v1152 = vpop.f32.mrf.mxu0
      %v1153 = vpop.f32.mrf.mxu0
      %v1154 = vadd.f32 %v311, %v1153
      %v1155 = vpop.f32.mrf.mxu0
      %1156 = vmatprep.mubr.bf16.mxu0 0
      %1157 = vmatmul.mubr.bf16.gmra.mxu0 %v758
      %v1158 = vpop.f32.mrf.mxu0
      %v1159 = vadd.f32 %v311, %v1158
      %v1160 = vpop.f32.mrf.mxu0
      %v1161 = vpop.f32.mrf.mxu0
      %v1162 = vadd.f32 %v311, %v1161
      %v1163 = vpop.f32.mrf.mxu0
      %1164 = vmatprep.mubr.bf16.mxu0 0
      %1165 = vmatmul.mubr.bf16.gmra.mxu0 %v761
      %v1166 = vpop.f32.mrf.mxu0
      %v1167 = vadd.f32 %v311, %v1166
      %v1168 = vpop.f32.mrf.mxu0
      %v1169 = vpop.f32.mrf.mxu0
      %v1170 = vadd.f32 %v311, %v1169
      %v1171 = vpop.f32.mrf.mxu0
      %1172 = vmatprep.mubr.bf16.mxu0 0
      %1173 = vmatmul.mubr.bf16.gmra.mxu0 %v764
      %v1174 = vpop.f32.mrf.mxu0
      %v1175 = vadd.f32 %v311, %v1174
      %v1176 = vpop.f32.mrf.mxu0
      %v1177 = vpop.f32.mrf.mxu0
      %v1178 = vadd.f32 %v311, %v1177
      %v1179 = vpop.f32.mrf.mxu0
      %1180 = vmatprep.mubr.bf16.mxu0 0
      %1181 = vmatmul.mubr.bf16.gmra.mxu0 %v767
      %v1182 = vpop.f32.mrf.mxu0
      %v1183 = vadd.f32 %v311, %v1182
      %v1184 = vpop.f32.mrf.mxu0
      %v1185 = vpop.f32.mrf.mxu0
      %v1186 = vadd.f32 %v311, %v1185
      %v1187 = vpop.f32.mrf.mxu0
      %1188 = vmatprep.mubr.bf16.mxu0 0
      %1189 = vmatmul.mubr.bf16.gmra.mxu0 %v770
      %v1190 = vpop.f32.mrf.mxu0
      %v1191 = vadd.f32 %v311, %v1190
      %v1192 = vpop.f32.mrf.mxu0
      %v1193 = vpop.f32.mrf.mxu0
      %v1194 = vadd.f32 %v311, %v1193
      %v1195 = vpop.f32.mrf.mxu0
      %1196 = vmatprep.mubr.bf16.mxu0 0
      %1197 = vmatmul.mubr.bf16.gmra.mxu0 %v773
      %v1198 = vpop.f32.mrf.mxu0
      %v1199 = vadd.f32 %v311, %v1198
      %v1200 = vpop.f32.mrf.mxu0
      %v1201 = vpop.f32.mrf.mxu0
      %v1202 = vadd.f32 %v311, %v1201
      %v1203 = vpop.f32.mrf.mxu0
      %1204 = vmatprep.mubr.bf16.mxu0 0
      %1205 = vmatmul.mubr.bf16.gmra.mxu0 %v776
      %v1206 = vpop.f32.mrf.mxu0
      %v1207 = vadd.f32 %v311, %v1206
      %v1208 = vpop.f32.mrf.mxu0
      %v1209 = vpop.f32.mrf.mxu0
      %v1210 = vadd.f32 %v311, %v1209
      %v1211 = vpop.f32.mrf.mxu0
      %1212 = vmatprep.mubr.bf16.mxu0 0
      %1213 = vmatmul.mubr.bf16.gmra.mxu0 %v779
      %v1214 = vpop.f32.mrf.mxu0
      %v1215 = vadd.f32 %v311, %v1214
      %v1216 = vpop.f32.mrf.mxu0
      %v1217 = vpop.f32.mrf.mxu0
      %v1218 = vadd.f32 %v311, %v1217
      %v1219 = vpop.f32.mrf.mxu0
      %1220 = vmatprep.mubr.bf16.mxu0 0
      %1221 = vmatmul.mubr.bf16.gmra.mxu0 %v782
      %v1222 = vpop.f32.mrf.mxu0
      %v1223 = vadd.f32 %v311, %v1222
      %v1224 = vpop.f32.mrf.mxu0
      %v1225 = vpop.f32.mrf.mxu0
      %v1226 = vadd.f32 %v311, %v1225
      %v1227 = vpop.f32.mrf.mxu0
      %1228 = vmatprep.mubr.bf16.mxu0 0
      %1229 = vmatmul.mubr.bf16.gmra.mxu0 %v785
      %v1230 = vpop.f32.mrf.mxu0
      %v1231 = vadd.f32 %v311, %v1230
      %v1232 = vpop.f32.mrf.mxu0
      %v1233 = vpop.f32.mrf.mxu0
      %v1234 = vadd.f32 %v311, %v1233
      %v1235 = vpop.f32.mrf.mxu0
      %1236 = vmatprep.mubr.bf16.mxu0 0
      %1237 = vmatmul.mubr.bf16.gmra.mxu0 %v788
      %v1238 = vpop.f32.mrf.mxu0
      %v1239 = vadd.f32 %v311, %v1238
      %v1240 = vpop.f32.mrf.mxu0
      %v1241 = vpop.f32.mrf.mxu0
      %v1242 = vadd.f32 %v311, %v1241
      %v1243 = vpop.f32.mrf.mxu0
      %1244 = vmatprep.mubr.bf16.mxu0 0
      %1245 = vmatmul.mubr.bf16.gmra.mxu0 %v791
      %v1246 = vpop.f32.mrf.mxu0
      %v1247 = vadd.f32 %v311, %v1246
      %v1248 = vpop.f32.mrf.mxu0
      %v1249 = vpop.f32.mrf.mxu0
      %v1250 = vadd.f32 %v311, %v1249
      %v1251 = vpop.f32.mrf.mxu0
      %1252 = vmatprep.mubr.bf16.mxu0 0
      %1253 = vmatmul.mubr.bf16.gmra.mxu0 %v794
      %v1254 = vpop.f32.mrf.mxu0
      %v1255 = vadd.f32 %v311, %v1254
      %v1256 = vpop.f32.mrf.mxu0
      %v1257 = vpop.f32.mrf.mxu0
      %v1258 = vadd.f32 %v311, %v1257
      %v1259 = vpop.f32.mrf.mxu0
      %1260 = vmatprep.mubr.bf16.mxu0 0
      %1261 = vmatmul.mubr.bf16.gmra.mxu0 %v797
      %v1262 = vpop.f32.mrf.mxu0
      %v1263 = vadd.f32 %v311, %v1262
      %v1264 = vpop.f32.mrf.mxu0
      %v1265 = vpop.f32.mrf.mxu0
      %v1266 = vadd.f32 %v311, %v1265
      %v1267 = vpop.f32.mrf.mxu0
      %1268 = vmatprep.mubr.bf16.mxu0 0
      %1269 = vmatmul.mubr.bf16.gmra.mxu0 %v800
      %v1270 = vpop.f32.mrf.mxu0
      %v1271 = vadd.f32 %v311, %v1270
      %v1272 = vpop.f32.mrf.mxu0
      %v1273 = vpop.f32.mrf.mxu0
      %v1274 = vadd.f32 %v311, %v1273
      %v1275 = vpop.f32.mrf.mxu0
      %1276 = vmatprep.mubr.bf16.mxu0 0
      %1277 = vmatmul.mubr.bf16.gmra.mxu0 %v803
      %v1278 = vpop.f32.mrf.mxu0
      %v1279 = vadd.f32 %v311, %v1278
      %v1280 = vpop.f32.mrf.mxu0
      %v1281 = vpop.f32.mrf.mxu0
      %v1282 = vadd.f32 %v311, %v1281
      %v1283 = vpop.f32.mrf.mxu0
      %1284 = vmatprep.mubr.bf16.mxu0 0
      %1285 = vmatmul.mubr.bf16.gmra.mxu0 %v806
      %v1286 = vpop.f32.mrf.mxu0
      %v1287 = vadd.f32 %v311, %v1286
      %v1288 = vpop.f32.mrf.mxu0
      %v1289 = vpop.f32.mrf.mxu0
      %v1290 = vadd.f32 %v311, %v1289
      %v1291 = vpop.f32.mrf.mxu0
      %1292 = vmatprep.mubr.bf16.mxu0 0
      %1293 = vmatmul.mubr.bf16.gmra.mxu0 %v809
      %v1294 = vpop.f32.mrf.mxu0
      %v1295 = vadd.f32 %v311, %v1294
      %v1296 = vpop.f32.mrf.mxu0
      %v1297 = vpop.f32.mrf.mxu0
      %v1298 = vadd.f32 %v311, %v1297
      %v1299 = vpop.f32.mrf.mxu0
      %1300 = vmatprep.mubr.bf16.mxu0 0
      %1301 = vmatmul.mubr.bf16.gmra.mxu0 %v812
      %v1302 = vpop.f32.mrf.mxu0
      %v1303 = vadd.f32 %v311, %v1302
      %v1304 = vpop.f32.mrf.mxu0
      %v1305 = vpop.f32.mrf.mxu0
      %v1306 = vadd.f32 %v311, %v1305
      %v1307 = vpop.f32.mrf.mxu0
      %1308 = vmatprep.mubr.bf16.mxu0 0
      %1309 = vmatmul.mubr.bf16.gmra.mxu0 %v815
      %v1310 = vpop.f32.mrf.mxu0
      %v1311 = vadd.f32 %v311, %v1310
      %v1312 = vpop.f32.mrf.mxu0
      %v1313 = vpop.f32.mrf.mxu0
      %v1314 = vadd.f32 %v311, %v1313
      %v1315 = vpop.f32.mrf.mxu0
      %1316 = vmatprep.mubr.bf16.mxu0 0
      %1317 = vmatmul.mubr.bf16.gmra.mxu0 %v818
      %v1318 = vpop.f32.mrf.mxu0
      %v1319 = vadd.f32 %v311, %v1318
      %v1320 = vpop.f32.mrf.mxu0
      %v1321 = vpop.f32.mrf.mxu0
      %v1322 = vadd.f32 %v311, %v1321
      %v1323 = vpop.f32.mrf.mxu0
      %1324 = vmatprep.mubr.bf16.mxu0 0
      %1325 = vmatmul.mubr.bf16.gmra.mxu0 %v821
      %v1326 = vpop.f32.mrf.mxu0
      %v1327 = vadd.f32 %v311, %v1326
      %v1328 = vpop.f32.mrf.mxu0
      %v1329 = vpop.f32.mrf.mxu0
      %v1330 = vadd.f32 %v311, %v1329
      %v1331 = vpop.f32.mrf.mxu0
      %1332 = vmatprep.mubr.bf16.mxu0 0
      %1333 = vmatmul.mubr.bf16.gmra.mxu0 %v824
      %v1334 = vpop.f32.mrf.mxu0
      %v1335 = vadd.f32 %v311, %v1334
      %v1336 = vpop.f32.mrf.mxu0
      %v1337 = vpop.f32.mrf.mxu0
      %v1338 = vadd.f32 %v311, %v1337
      %v1339 = vpop.f32.mrf.mxu0
      %1340 = vmatprep.mubr.bf16.mxu0 0
      %1341 = vmatmul.mubr.bf16.gmra.mxu0 %v827
      %v1342 = vpop.f32.mrf.mxu0
      %v1343 = vadd.f32 %v311, %v1342
      %v1344 = vpop.f32.mrf.mxu0
      %v1345 = vpop.f32.mrf.mxu0
      %v1346 = vadd.f32 %v311, %v1345
      %v1347 = vpop.f32.mrf.mxu0
      %1348 = vmatprep.mubr.bf16.mxu0 0
      %1349 = vmatmul.mubr.bf16.gmra.mxu0 %v830
      %v1350 = vpop.f32.mrf.mxu0
      %v1351 = vadd.f32 %v311, %v1350
      %v1352 = vpop.f32.mrf.mxu0
      %v1353 = vpop.f32.mrf.mxu0
      %v1354 = vadd.f32 %v311, %v1353
      %v1355 = vpop.f32.mrf.mxu0
      %1356 = vmatprep.mubr.bf16.mxu0 0
      %1357 = vmatmul.mubr.bf16.gmra.mxu0 %v833
      %v1358 = vpop.f32.mrf.mxu0
      %v1359 = vadd.f32 %v311, %v1358
      %v1360 = vpop.f32.mrf.mxu0
      %v1361 = vpop.f32.mrf.mxu0
      %v1362 = vadd.f32 %v311, %v1361
      %v1363 = vpop.f32.mrf.mxu0
      %1364 = vmatprep.mubr.bf16.mxu0 0
      %1365 = vmatmul.mubr.bf16.gmra.mxu0 %v836
      %v1366 = vpop.f32.mrf.mxu0
      %v1367 = vadd.f32 %v311, %v1366
      %v1368 = vpop.f32.mrf.mxu0
      %v1369 = vpop.f32.mrf.mxu0
      %v1370 = vadd.f32 %v311, %v1369
      %v1371 = vpop.f32.mrf.mxu0
      %1372 = vmatprep.mubr.bf16.mxu0 0
      %1373 = vmatmul.mubr.bf16.gmra.mxu0 %v839
      %v1374 = vpop.f32.mrf.mxu0
      %v1375 = vadd.f32 %v311, %v1374
      %v1376 = vpop.f32.mrf.mxu0
      %v1377 = vpop.f32.mrf.mxu0
      %v1378 = vadd.f32 %v311, %v1377
      %v1379 = vpop.f32.mrf.mxu0
      %1380 = vmatprep.mubr.bf16.mxu0 0
      %1381 = vmatmul.mubr.bf16.gmra.mxu0 %v842
      %v1382 = vpop.f32.mrf.mxu0
      %v1383 = vadd.f32 %v311, %v1382
      %v1384 = vpop.f32.mrf.mxu0
      %v1385 = vpop.f32.mrf.mxu0
      %v1386 = vadd.f32 %v311, %v1385
      %v1387 = vpop.f32.mrf.mxu0
      %1388 = vdwg.mxu0
      %vm1389 = vcmp.gt.f32.partialorder %v879, 0.0
      %vm1390 = vcmp.gt.f32.partialorder %v882, 0.0
      %vm1391 = vcmp.gt.f32.partialorder %v887, 0.0
      %vm1392 = vcmp.gt.f32.partialorder %v890, 0.0
      %vm1393 = vcmp.gt.f32.partialorder %v895, 0.0
      %vm1394 = vcmp.gt.f32.partialorder %v898, 0.0
      %vm1395 = vcmp.gt.f32.partialorder %v903, 0.0
      %vm1396 = vcmp.gt.f32.partialorder %v906, 0.0
      %vm1397 = vcmp.gt.f32.partialorder %v911, 0.0
      %vm1398 = vcmp.gt.f32.partialorder %v914, 0.0
      %vm1399 = vcmp.gt.f32.partialorder %v919, 0.0
      %vm1400 = vcmp.gt.f32.partialorder %v922, 0.0
      %vm1401 = vcmp.gt.f32.partialorder %v927, 0.0
      %vm1402 = vcmp.gt.f32.partialorder %v930, 0.0
      %vm1403 = vcmp.gt.f32.partialorder %v935, 0.0
      %vm1404 = vcmp.gt.f32.partialorder %v938, 0.0
      %vm1405 = vcmp.gt.f32.partialorder %v943, 0.0
      %vm1406 = vcmp.gt.f32.partialorder %v946, 0.0
      %vm1407 = vcmp.gt.f32.partialorder %v951, 0.0
      %vm1408 = vcmp.gt.f32.partialorder %v954, 0.0
      %vm1409 = vcmp.gt.f32.partialorder %v959, 0.0
      %vm1410 = vcmp.gt.f32.partialorder %v962, 0.0
      %vm1411 = vcmp.gt.f32.partialorder %v967, 0.0
      %vm1412 = vcmp.gt.f32.partialorder %v970, 0.0
      %vm1413 = vcmp.gt.f32.partialorder %v975, 0.0
      %vm1414 = vcmp.gt.f32.partialorder %v978, 0.0
      %vm1415 = vcmp.gt.f32.partialorder %v983, 0.0
      %vm1416 = vcmp.gt.f32.partialorder %v986, 0.0
      %vm1417 = vcmp.gt.f32.partialorder %v991, 0.0
      %vm1418 = vcmp.gt.f32.partialorder %v994, 0.0
      %vm1419 = vcmp.gt.f32.partialorder %v999, 0.0
      %vm1420 = vcmp.gt.f32.partialorder %v1002, 0.0
      %vm1421 = vcmp.gt.f32.partialorder %v1007, 0.0
      %vm1422 = vcmp.gt.f32.partialorder %v1010, 0.0
      %vm1423 = vcmp.gt.f32.partialorder %v1015, 0.0
      %vm1424 = vcmp.gt.f32.partialorder %v1018, 0.0
      %vm1425 = vcmp.gt.f32.partialorder %v1023, 0.0
      %vm1426 = vcmp.gt.f32.partialorder %v1026, 0.0
      %vm1427 = vcmp.gt.f32.partialorder %v1031, 0.0
      %vm1428 = vcmp.gt.f32.partialorder %v1034, 0.0
      %vm1429 = vcmp.gt.f32.partialorder %v1039, 0.0
      %vm1430 = vcmp.gt.f32.partialorder %v1042, 0.0
      %vm1431 = vcmp.gt.f32.partialorder %v1047, 0.0
      %vm1432 = vcmp.gt.f32.partialorder %v1050, 0.0
      %vm1433 = vcmp.gt.f32.partialorder %v1055, 0.0
      %vm1434 = vcmp.gt.f32.partialorder %v1058, 0.0
      %vm1435 = vcmp.gt.f32.partialorder %v1063, 0.0
      %vm1436 = vcmp.gt.f32.partialorder %v1066, 0.0
      %vm1437 = vcmp.gt.f32.partialorder %v1071, 0.0
      %vm1438 = vcmp.gt.f32.partialorder %v1074, 0.0
      %vm1439 = vcmp.gt.f32.partialorder %v1079, 0.0
      %vm1440 = vcmp.gt.f32.partialorder %v1082, 0.0
      %vm1441 = vcmp.gt.f32.partialorder %v1087, 0.0
      %vm1442 = vcmp.gt.f32.partialorder %v1090, 0.0
      %vm1443 = vcmp.gt.f32.partialorder %v1095, 0.0
      %vm1444 = vcmp.gt.f32.partialorder %v1098, 0.0
      %vm1445 = vcmp.gt.f32.partialorder %v1103, 0.0
      %vm1446 = vcmp.gt.f32.partialorder %v1106, 0.0
      %vm1447 = vcmp.gt.f32.partialorder %v1111, 0.0
      %vm1448 = vcmp.gt.f32.partialorder %v1114, 0.0
      %vm1449 = vcmp.gt.f32.partialorder %v1119, 0.0
      %vm1450 = vcmp.gt.f32.partialorder %v1122, 0.0
      %vm1451 = vcmp.gt.f32.partialorder %v1127, 0.0
      %vm1452 = vcmp.gt.f32.partialorder %v1130, 0.0
      %vm1453 = vcmp.gt.f32.partialorder %v1135, 0.0
      %vm1454 = vcmp.gt.f32.partialorder %v1138, 0.0
      %vm1455 = vcmp.gt.f32.partialorder %v1143, 0.0
      %vm1456 = vcmp.gt.f32.partialorder %v1146, 0.0
      %vm1457 = vcmp.gt.f32.partialorder %v1151, 0.0
      %vm1458 = vcmp.gt.f32.partialorder %v1154, 0.0
      %vm1459 = vcmp.gt.f32.partialorder %v1159, 0.0
      %vm1460 = vcmp.gt.f32.partialorder %v1162, 0.0
      %vm1461 = vcmp.gt.f32.partialorder %v1167, 0.0
      %vm1462 = vcmp.gt.f32.partialorder %v1170, 0.0
      %vm1463 = vcmp.gt.f32.partialorder %v1175, 0.0
      %vm1464 = vcmp.gt.f32.partialorder %v1178, 0.0
      %vm1465 = vcmp.gt.f32.partialorder %v1183, 0.0
      %vm1466 = vcmp.gt.f32.partialorder %v1186, 0.0
      %vm1467 = vcmp.gt.f32.partialorder %v1191, 0.0
      %vm1468 = vcmp.gt.f32.partialorder %v1194, 0.0
      %vm1469 = vcmp.gt.f32.partialorder %v1199, 0.0
      %vm1470 = vcmp.gt.f32.partialorder %v1202, 0.0
      %vm1471 = vcmp.gt.f32.partialorder %v1207, 0.0
      %vm1472 = vcmp.gt.f32.partialorder %v1210, 0.0
      %vm1473 = vcmp.gt.f32.partialorder %v1215, 0.0
      %vm1474 = vcmp.gt.f32.partialorder %v1218, 0.0
      %vm1475 = vcmp.gt.f32.partialorder %v1223, 0.0
      %vm1476 = vcmp.gt.f32.partialorder %v1226, 0.0
      %vm1477 = vcmp.gt.f32.partialorder %v1231, 0.0
      %vm1478 = vcmp.gt.f32.partialorder %v1234, 0.0
      %vm1479 = vcmp.gt.f32.partialorder %v1239, 0.0
      %vm1480 = vcmp.gt.f32.partialorder %v1242, 0.0
      %vm1481 = vcmp.gt.f32.partialorder %v1247, 0.0
      %vm1482 = vcmp.gt.f32.partialorder %v1250, 0.0
      %vm1483 = vcmp.gt.f32.partialorder %v1255, 0.0
      %vm1484 = vcmp.gt.f32.partialorder %v1258, 0.0
      %vm1485 = vcmp.gt.f32.partialorder %v1263, 0.0
      %vm1486 = vcmp.gt.f32.partialorder %v1266, 0.0
      %vm1487 = vcmp.gt.f32.partialorder %v1271, 0.0
      %vm1488 = vcmp.gt.f32.partialorder %v1274, 0.0
      %vm1489 = vcmp.gt.f32.partialorder %v1279, 0.0
      %vm1490 = vcmp.gt.f32.partialorder %v1282, 0.0
      %vm1491 = vcmp.gt.f32.partialorder %v1287, 0.0
      %vm1492 = vcmp.gt.f32.partialorder %v1290, 0.0
      %vm1493 = vcmp.gt.f32.partialorder %v1295, 0.0
      %vm1494 = vcmp.gt.f32.partialorder %v1298, 0.0
      %vm1495 = vcmp.gt.f32.partialorder %v1303, 0.0
      %vm1496 = vcmp.gt.f32.partialorder %v1306, 0.0
      %vm1497 = vcmp.gt.f32.partialorder %v1311, 0.0
      %vm1498 = vcmp.gt.f32.partialorder %v1314, 0.0
      %vm1499 = vcmp.gt.f32.partialorder %v1319, 0.0
      %vm1500 = vcmp.gt.f32.partialorder %v1322, 0.0
      %vm1501 = vcmp.gt.f32.partialorder %v1327, 0.0
      %vm1502 = vcmp.gt.f32.partialorder %v1330, 0.0
      %vm1503 = vcmp.gt.f32.partialorder %v1335, 0.0
      %vm1504 = vcmp.gt.f32.partialorder %v1338, 0.0
      %vm1505 = vcmp.gt.f32.partialorder %v1343, 0.0
      %vm1506 = vcmp.gt.f32.partialorder %v1346, 0.0
      %vm1507 = vcmp.gt.f32.partialorder %v1351, 0.0
      %vm1508 = vcmp.gt.f32.partialorder %v1354, 0.0
      %vm1509 = vcmp.gt.f32.partialorder %v1359, 0.0
      %vm1510 = vcmp.gt.f32.partialorder %v1362, 0.0
      %vm1511 = vcmp.gt.f32.partialorder %v1367, 0.0
      %vm1512 = vcmp.gt.f32.partialorder %v1370, 0.0
      %vm1513 = vcmp.gt.f32.partialorder %v1375, 0.0
      %vm1514 = vcmp.gt.f32.partialorder %v1378, 0.0
      %vm1515 = vcmp.gt.f32.partialorder %v1383, 0.0
      %vm1516 = vcmp.gt.f32.partialorder %v1386, 0.0
      %v1517 = vmul.f32 %v879, 0.2
      %v1518 = vmul.f32 %v882, 0.2
      %v1519 = vmul.f32 %v887, 0.2
      %v1520 = vmul.f32 %v890, 0.2
      %v1521 = vmul.f32 %v895, 0.2
      %v1522 = vmul.f32 %v898, 0.2
      %v1523 = vmul.f32 %v903, 0.2
      %v1524 = vmul.f32 %v906, 0.2
      %v1525 = vmul.f32 %v911, 0.2
      %v1526 = vmul.f32 %v914, 0.2
      %v1527 = vmul.f32 %v919, 0.2
      %v1528 = vmul.f32 %v922, 0.2
      %v1529 = vmul.f32 %v927, 0.2
      %v1530 = vmul.f32 %v930, 0.2
      %v1531 = vmul.f32 %v935, 0.2
      %v1532 = vmul.f32 %v938, 0.2
      %v1533 = vmul.f32 %v943, 0.2
      %v1534 = vmul.f32 %v946, 0.2
      %v1535 = vmul.f32 %v951, 0.2
      %v1536 = vmul.f32 %v954, 0.2
      %v1537 = vmul.f32 %v959, 0.2
      %v1538 = vmul.f32 %v962, 0.2
      %v1539 = vmul.f32 %v967, 0.2
      %v1540 = vmul.f32 %v970, 0.2
      %v1541 = vmul.f32 %v975, 0.2
      %v1542 = vmul.f32 %v978, 0.2
      %v1543 = vmul.f32 %v983, 0.2
      %v1544 = vmul.f32 %v986, 0.2
      %v1545 = vmul.f32 %v991, 0.2
      %v1546 = vmul.f32 %v994, 0.2
      %v1547 = vmul.f32 %v999, 0.2
      %v1548 = vmul.f32 %v1002, 0.2
      %v1549 = vmul.f32 %v1007, 0.2
      %v1550 = vmul.f32 %v1010, 0.2
      %v1551 = vmul.f32 %v1015, 0.2
      %v1552 = vmul.f32 %v1018, 0.2
      %v1553 = vmul.f32 %v1023, 0.2
      %v1554 = vmul.f32 %v1026, 0.2
      %v1555 = vmul.f32 %v1031, 0.2
      %v1556 = vmul.f32 %v1034, 0.2
      %v1557 = vmul.f32 %v1039, 0.2
      %v1558 = vmul.f32 %v1042, 0.2
      %v1559 = vmul.f32 %v1047, 0.2
      %v1560 = vmul.f32 %v1050, 0.2
      %v1561 = vmul.f32 %v1055, 0.2
      %v1562 = vmul.f32 %v1058, 0.2
      %v1563 = vmul.f32 %v1063, 0.2
      %v1564 = vmul.f32 %v1066, 0.2
      %v1565 = vmul.f32 %v1071, 0.2
      %v1566 = vmul.f32 %v1074, 0.2
      %v1567 = vmul.f32 %v1079, 0.2
      %v1568 = vmul.f32 %v1082, 0.2
      %v1569 = vmul.f32 %v1087, 0.2
      %v1570 = vmul.f32 %v1090, 0.2
      %v1571 = vmul.f32 %v1095, 0.2
      %v1572 = vmul.f32 %v1098, 0.2
      %v1573 = vmul.f32 %v1103, 0.2
      %v1574 = vmul.f32 %v1106, 0.2
      %v1575 = vmul.f32 %v1111, 0.2
      %v1576 = vmul.f32 %v1114, 0.2
      %v1577 = vmul.f32 %v1119, 0.2
      %v1578 = vmul.f32 %v1122, 0.2
      %v1579 = vmul.f32 %v1127, 0.2
      %v1580 = vmul.f32 %v1130, 0.2
      %v1581 = vmul.f32 %v1135, 0.2
      %v1582 = vmul.f32 %v1138, 0.2
      %v1583 = vmul.f32 %v1143, 0.2
      %v1584 = vmul.f32 %v1146, 0.2
      %v1585 = vmul.f32 %v1151, 0.2
      %v1586 = vmul.f32 %v1154, 0.2
      %v1587 = vmul.f32 %v1159, 0.2
      %v1588 = vmul.f32 %v1162, 0.2
      %v1589 = vmul.f32 %v1167, 0.2
      %v1590 = vmul.f32 %v1170, 0.2
      %v1591 = vmul.f32 %v1175, 0.2
      %v1592 = vmul.f32 %v1178, 0.2
      %v1593 = vmul.f32 %v1183, 0.2
      %v1594 = vmul.f32 %v1186, 0.2
      %v1595 = vmul.f32 %v1191, 0.2
      %v1596 = vmul.f32 %v1194, 0.2
      %v1597 = vmul.f32 %v1199, 0.2
      %v1598 = vmul.f32 %v1202, 0.2
      %v1599 = vmul.f32 %v1207, 0.2
      %v1600 = vmul.f32 %v1210, 0.2
      %v1601 = vmul.f32 %v1215, 0.2
      %v1602 = vmul.f32 %v1218, 0.2
      %v1603 = vmul.f32 %v1223, 0.2
      %v1604 = vmul.f32 %v1226, 0.2
      %v1605 = vmul.f32 %v1231, 0.2
      %v1606 = vmul.f32 %v1234, 0.2
      %v1607 = vmul.f32 %v1239, 0.2
      %v1608 = vmul.f32 %v1242, 0.2
      %v1609 = vmul.f32 %v1247, 0.2
      %v1610 = vmul.f32 %v1250, 0.2
      %v1611 = vmul.f32 %v1255, 0.2
      %v1612 = vmul.f32 %v1258, 0.2
      %v1613 = vmul.f32 %v1263, 0.2
      %v1614 = vmul.f32 %v1266, 0.2
      %v1615 = vmul.f32 %v1271, 0.2
      %v1616 = vmul.f32 %v1274, 0.2
      %v1617 = vmul.f32 %v1279, 0.2
      %v1618 = vmul.f32 %v1282, 0.2
      %v1619 = vmul.f32 %v1287, 0.2
      %v1620 = vmul.f32 %v1290, 0.2
      %v1621 = vmul.f32 %v1295, 0.2
      %v1622 = vmul.f32 %v1298, 0.2
      %v1623 = vmul.f32 %v1303, 0.2
      %v1624 = vmul.f32 %v1306, 0.2
      %v1625 = vmul.f32 %v1311, 0.2
      %v1626 = vmul.f32 %v1314, 0.2
      %v1627 = vmul.f32 %v1319, 0.2
      %v1628 = vmul.f32 %v1322, 0.2
      %v1629 = vmul.f32 %v1327, 0.2
      %v1630 = vmul.f32 %v1330, 0.2
      %v1631 = vmul.f32 %v1335, 0.2
      %v1632 = vmul.f32 %v1338, 0.2
      %v1633 = vmul.f32 %v1343, 0.2
      %v1634 = vmul.f32 %v1346, 0.2
      %v1635 = vmul.f32 %v1351, 0.2
      %v1636 = vmul.f32 %v1354, 0.2
      %v1637 = vmul.f32 %v1359, 0.2
      %v1638 = vmul.f32 %v1362, 0.2
      %v1639 = vmul.f32 %v1367, 0.2
      %v1640 = vmul.f32 %v1370, 0.2
      %v1641 = vmul.f32 %v1375, 0.2
      %v1642 = vmul.f32 %v1378, 0.2
      %v1643 = vmul.f32 %v1383, 0.2
      %v1644 = vmul.f32 %v1386, 0.2
      %v1645 = vsel %vm1389, %v879, %v1517
      %v1646 = vsel %vm1390, %v882, %v1518
      %v1647 = vsel %vm1391, %v887, %v1519
      %v1648 = vsel %vm1392, %v890, %v1520
      %v1649 = vsel %vm1393, %v895, %v1521
      %v1650 = vsel %vm1394, %v898, %v1522
      %v1651 = vsel %vm1395, %v903, %v1523
      %v1652 = vsel %vm1396, %v906, %v1524
      %v1653 = vsel %vm1397, %v911, %v1525
      %v1654 = vsel %vm1398, %v914, %v1526
      %v1655 = vsel %vm1399, %v919, %v1527
      %v1656 = vsel %vm1400, %v922, %v1528
      %v1657 = vsel %vm1401, %v927, %v1529
      %v1658 = vsel %vm1402, %v930, %v1530
      %v1659 = vsel %vm1403, %v935, %v1531
      %v1660 = vsel %vm1404, %v938, %v1532
      %v1661 = vsel %vm1405, %v943, %v1533
      %v1662 = vsel %vm1406, %v946, %v1534
      %v1663 = vsel %vm1407, %v951, %v1535
      %v1664 = vsel %vm1408, %v954, %v1536
      %v1665 = vsel %vm1409, %v959, %v1537
      %v1666 = vsel %vm1410, %v962, %v1538
      %v1667 = vsel %vm1411, %v967, %v1539
      %v1668 = vsel %vm1412, %v970, %v1540
      %v1669 = vsel %vm1413, %v975, %v1541
      %v1670 = vsel %vm1414, %v978, %v1542
      %v1671 = vsel %vm1415, %v983, %v1543
      %v1672 = vsel %vm1416, %v986, %v1544
      %v1673 = vsel %vm1417, %v991, %v1545
      %v1674 = vsel %vm1418, %v994, %v1546
      %v1675 = vsel %vm1419, %v999, %v1547
      %v1676 = vsel %vm1420, %v1002, %v1548
      %v1677 = vsel %vm1421, %v1007, %v1549
      %v1678 = vsel %vm1422, %v1010, %v1550
      %v1679 = vsel %vm1423, %v1015, %v1551
      %v1680 = vsel %vm1424, %v1018, %v1552
      %v1681 = vsel %vm1425, %v1023, %v1553
      %v1682 = vsel %vm1426, %v1026, %v1554
      %v1683 = vsel %vm1427, %v1031, %v1555
      %v1684 = vsel %vm1428, %v1034, %v1556
      %v1685 = vsel %vm1429, %v1039, %v1557
      %v1686 = vsel %vm1430, %v1042, %v1558
      %v1687 = vsel %vm1431, %v1047, %v1559
      %v1688 = vsel %vm1432, %v1050, %v1560
      %v1689 = vsel %vm1433, %v1055, %v1561
      %v1690 = vsel %vm1434, %v1058, %v1562
      %v1691 = vsel %vm1435, %v1063, %v1563
      %v1692 = vsel %vm1436, %v1066, %v1564
      %v1693 = vsel %vm1437, %v1071, %v1565
      %v1694 = vsel %vm1438, %v1074, %v1566
      %v1695 = vsel %vm1439, %v1079, %v1567
      %v1696 = vsel %vm1440, %v1082, %v1568
      %v1697 = vsel %vm1441, %v1087, %v1569
      %v1698 = vsel %vm1442, %v1090, %v1570
      %v1699 = vsel %vm1443, %v1095, %v1571
      %v1700 = vsel %vm1444, %v1098, %v1572
      %v1701 = vsel %vm1445, %v1103, %v1573
      %v1702 = vsel %vm1446, %v1106, %v1574
      %v1703 = vsel %vm1447, %v1111, %v1575
      %v1704 = vsel %vm1448, %v1114, %v1576
      %v1705 = vsel %vm1449, %v1119, %v1577
      %v1706 = vsel %vm1450, %v1122, %v1578
      %v1707 = vsel %vm1451, %v1127, %v1579
      %v1708 = vsel %vm1452, %v1130, %v1580
      %v1709 = vsel %vm1453, %v1135, %v1581
      %v1710 = vsel %vm1454, %v1138, %v1582
      %v1711 = vsel %vm1455, %v1143, %v1583
      %v1712 = vsel %vm1456, %v1146, %v1584
      %v1713 = vsel %vm1457, %v1151, %v1585
      %v1714 = vsel %vm1458, %v1154, %v1586
      %v1715 = vsel %vm1459, %v1159, %v1587
      %v1716 = vsel %vm1460, %v1162, %v1588
      %v1717 = vsel %vm1461, %v1167, %v1589
      %v1718 = vsel %vm1462, %v1170, %v1590
      %v1719 = vsel %vm1463, %v1175, %v1591
      %v1720 = vsel %vm1464, %v1178, %v1592
      %v1721 = vsel %vm1465, %v1183, %v1593
      %v1722 = vsel %vm1466, %v1186, %v1594
      %v1723 = vsel %vm1467, %v1191, %v1595
      %v1724 = vsel %vm1468, %v1194, %v1596
      %v1725 = vsel %vm1469, %v1199, %v1597
      %v1726 = vsel %vm1470, %v1202, %v1598
      %v1727 = vsel %vm1471, %v1207, %v1599
      %v1728 = vsel %vm1472, %v1210, %v1600
      %v1729 = vsel %vm1473, %v1215, %v1601
      %v1730 = vsel %vm1474, %v1218, %v1602
      %v1731 = vsel %vm1475, %v1223, %v1603
      %v1732 = vsel %vm1476, %v1226, %v1604
      %v1733 = vsel %vm1477, %v1231, %v1605
      %v1734 = vsel %vm1478, %v1234, %v1606
      %v1735 = vsel %vm1479, %v1239, %v1607
      %v1736 = vsel %vm1480, %v1242, %v1608
      %v1737 = vsel %vm1481, %v1247, %v1609
      %v1738 = vsel %vm1482, %v1250, %v1610
      %v1739 = vsel %vm1483, %v1255, %v1611
      %v1740 = vsel %vm1484, %v1258, %v1612
      %v1741 = vsel %vm1485, %v1263, %v1613
      %v1742 = vsel %vm1486, %v1266, %v1614
      %v1743 = vsel %vm1487, %v1271, %v1615
      %v1744 = vsel %vm1488, %v1274, %v1616
      %v1745 = vsel %vm1489, %v1279, %v1617
      %v1746 = vsel %vm1490, %v1282, %v1618
      %v1747 = vsel %vm1491, %v1287, %v1619
      %v1748 = vsel %vm1492, %v1290, %v1620
      %v1749 = vsel %vm1493, %v1295, %v1621
      %v1750 = vsel %vm1494, %v1298, %v1622
      %v1751 = vsel %vm1495, %v1303, %v1623
      %v1752 = vsel %vm1496, %v1306, %v1624
      %v1753 = vsel %vm1497, %v1311, %v1625
      %v1754 = vsel %vm1498, %v1314, %v1626
      %v1755 = vsel %vm1499, %v1319, %v1627
      %v1756 = vsel %vm1500, %v1322, %v1628
      %v1757 = vsel %vm1501, %v1327, %v1629
      %v1758 = vsel %vm1502, %v1330, %v1630
      %v1759 = vsel %vm1503, %v1335, %v1631
      %v1760 = vsel %vm1504, %v1338, %v1632
      %v1761 = vsel %vm1505, %v1343, %v1633
      %v1762 = vsel %vm1506, %v1346, %v1634
      %v1763 = vsel %vm1507, %v1351, %v1635
      %v1764 = vsel %vm1508, %v1354, %v1636
      %v1765 = vsel %vm1509, %v1359, %v1637
      %v1766 = vsel %vm1510, %v1362, %v1638
      %v1767 = vsel %vm1511, %v1367, %v1639
      %v1768 = vsel %vm1512, %v1370, %v1640
      %v1769 = vsel %vm1513, %v1375, %v1641
      %v1770 = vsel %vm1514, %v1378, %v1642
      %v1771 = vsel %vm1515, %v1383, %v1643
      %v1772 = vsel %vm1516, %v1386, %v1644
      %vm1773 = vcmask 64512
      %1774 = vst.msk [vmem:[%s170] sm:$0xff] %vm1773, %v1645
      %1775 = vst.msk [vmem:[%s170 + $0x8] sm:$0xff] %vm1773, %v1646
      %1776 = vst.msk [vmem:[%s170 + $0x10] sm:$0xff] %vm1773, %v1647
      %1777 = vst.msk [vmem:[%s170 + $0x18] sm:$0xff] %vm1773, %v1648
      %1778 = vst.msk [vmem:[%s170 + $0x20] sm:$0xff] %vm1773, %v1649
      %1779 = vst.msk [vmem:[%s170 + $0x28] sm:$0xff] %vm1773, %v1650
      %1780 = vst.msk [vmem:[%s170 + $0x30] sm:$0xff] %vm1773, %v1651
      %1781 = vst.msk [vmem:[%s170 + $0x38] sm:$0xff] %vm1773, %v1652
      %1782 = vst.msk [vmem:[%s170 + $0x40] sm:$0xff] %vm1773, %v1653
      %1783 = vst.msk [vmem:[%s170 + $0x48] sm:$0xff] %vm1773, %v1654
      %1784 = vst.msk [vmem:[%s170 + $0x50] sm:$0xff] %vm1773, %v1655
      %1785 = vst.msk [vmem:[%s170 + $0x58] sm:$0xff] %vm1773, %v1656
      %1786 = vst.msk [vmem:[%s170 + $0x60] sm:$0xff] %vm1773, %v1657
      %1787 = vst.msk [vmem:[%s170 + $0x68] sm:$0xff] %vm1773, %v1658
      %1788 = vst.msk [vmem:[%s170 + $0x70] sm:$0xff] %vm1773, %v1659
      %1789 = vst.msk [vmem:[%s170 + $0x78] sm:$0xff] %vm1773, %v1660
      %1790 = vst.msk [vmem:[%s170 + $0x80] sm:$0xff] %vm1773, %v1661
      %1791 = vst.msk [vmem:[%s170 + $0x88] sm:$0xff] %vm1773, %v1662
      %1792 = vst.msk [vmem:[%s170 + $0x90] sm:$0xff] %vm1773, %v1663
      %1793 = vst.msk [vmem:[%s170 + $0x98] sm:$0xff] %vm1773, %v1664
      %1794 = vst.msk [vmem:[%s170 + $0xa0] sm:$0xff] %vm1773, %v1665
      %1795 = vst.msk [vmem:[%s170 + $0xa8] sm:$0xff] %vm1773, %v1666
      %1796 = vst.msk [vmem:[%s170 + $0xb0] sm:$0xff] %vm1773, %v1667
      %1797 = vst.msk [vmem:[%s170 + $0xb8] sm:$0xff] %vm1773, %v1668
      %1798 = vst.msk [vmem:[%s170 + $0xc0] sm:$0xff] %vm1773, %v1669
      %1799 = vst.msk [vmem:[%s170 + $0xc8] sm:$0xff] %vm1773, %v1670
      %1800 = vst.msk [vmem:[%s170 + $0xd0] sm:$0xff] %vm1773, %v1671
      %1801 = vst.msk [vmem:[%s170 + $0xd8] sm:$0xff] %vm1773, %v1672
      %1802 = vst.msk [vmem:[%s170 + $0xe0] sm:$0xff] %vm1773, %v1673
      %1803 = vst.msk [vmem:[%s170 + $0xe8] sm:$0xff] %vm1773, %v1674
      %1804 = vst.msk [vmem:[%s170 + $0xf0] sm:$0xff] %vm1773, %v1675
      %1805 = vst.msk [vmem:[%s170 + $0xf8] sm:$0xff] %vm1773, %v1676
      %1806 = vst.msk [vmem:[%s170 + $0x100] sm:$0xff] %vm1773, %v1677
      %1807 = vst.msk [vmem:[%s170 + $0x108] sm:$0xff] %vm1773, %v1678
      %1808 = vst.msk [vmem:[%s170 + $0x110] sm:$0xff] %vm1773, %v1679
      %1809 = vst.msk [vmem:[%s170 + $0x118] sm:$0xff] %vm1773, %v1680
      %1810 = vst.msk [vmem:[%s170 + $0x120] sm:$0xff] %vm1773, %v1681
      %1811 = vst.msk [vmem:[%s170 + $0x128] sm:$0xff] %vm1773, %v1682
      %1812 = vst.msk [vmem:[%s170 + $0x130] sm:$0xff] %vm1773, %v1683
      %1813 = vst.msk [vmem:[%s170 + $0x138] sm:$0xff] %vm1773, %v1684
      %1814 = vst.msk [vmem:[%s170 + $0x140] sm:$0xff] %vm1773, %v1685
      %1815 = vst.msk [vmem:[%s170 + $0x148] sm:$0xff] %vm1773, %v1686
      %1816 = vst.msk [vmem:[%s170 + $0x150] sm:$0xff] %vm1773, %v1687
      %1817 = vst.msk [vmem:[%s170 + $0x158] sm:$0xff] %vm1773, %v1688
      %1818 = vst.msk [vmem:[%s170 + $0x160] sm:$0xff] %vm1773, %v1689
      %1819 = vst.msk [vmem:[%s170 + $0x168] sm:$0xff] %vm1773, %v1690
      %1820 = vst.msk [vmem:[%s170 + $0x170] sm:$0xff] %vm1773, %v1691
      %1821 = vst.msk [vmem:[%s170 + $0x178] sm:$0xff] %vm1773, %v1692
      %1822 = vst.msk [vmem:[%s170 + $0x180] sm:$0xff] %vm1773, %v1693
      %1823 = vst.msk [vmem:[%s170 + $0x188] sm:$0xff] %vm1773, %v1694
      %1824 = vst.msk [vmem:[%s170 + $0x190] sm:$0xff] %vm1773, %v1695
      %1825 = vst.msk [vmem:[%s170 + $0x198] sm:$0xff] %vm1773, %v1696
      %1826 = vst.msk [vmem:[%s170 + $0x1a0] sm:$0xff] %vm1773, %v1697
      %1827 = vst.msk [vmem:[%s170 + $0x1a8] sm:$0xff] %vm1773, %v1698
      %1828 = vst.msk [vmem:[%s170 + $0x1b0] sm:$0xff] %vm1773, %v1699
      %1829 = vst.msk [vmem:[%s170 + $0x1b8] sm:$0xff] %vm1773, %v1700
      %1830 = vst.msk [vmem:[%s170 + $0x1c0] sm:$0xff] %vm1773, %v1701
      %1831 = vst.msk [vmem:[%s170 + $0x1c8] sm:$0xff] %vm1773, %v1702
      %1832 = vst.msk [vmem:[%s170 + $0x1d0] sm:$0xff] %vm1773, %v1703
      %1833 = vst.msk [vmem:[%s170 + $0x1d8] sm:$0xff] %vm1773, %v1704
      %1834 = vst.msk [vmem:[%s170 + $0x1e0] sm:$0xff] %vm1773, %v1705
      %1835 = vst.msk [vmem:[%s170 + $0x1e8] sm:$0xff] %vm1773, %v1706
      %1836 = vst.msk [vmem:[%s170 + $0x1f0] sm:$0xff] %vm1773, %v1707
      %1837 = vst.msk [vmem:[%s170 + $0x1f8] sm:$0xff] %vm1773, %v1708
      %1838 = vst.msk [vmem:[%s170 + $0x200] sm:$0xff] %vm1773, %v1709
      %1839 = vst.msk [vmem:[%s170 + $0x208] sm:$0xff] %vm1773, %v1710
      %1840 = vst.msk [vmem:[%s170 + $0x210] sm:$0xff] %vm1773, %v1711
      %1841 = vst.msk [vmem:[%s170 + $0x218] sm:$0xff] %vm1773, %v1712
      %1842 = vst.msk [vmem:[%s170 + $0x220] sm:$0xff] %vm1773, %v1713
      %1843 = vst.msk [vmem:[%s170 + $0x228] sm:$0xff] %vm1773, %v1714
      %1844 = vst.msk [vmem:[%s170 + $0x230] sm:$0xff] %vm1773, %v1715
      %1845 = vst.msk [vmem:[%s170 + $0x238] sm:$0xff] %vm1773, %v1716
      %1846 = vst.msk [vmem:[%s170 + $0x240] sm:$0xff] %vm1773, %v1717
      %1847 = vst.msk [vmem:[%s170 + $0x248] sm:$0xff] %vm1773, %v1718
      %1848 = vst.msk [vmem:[%s170 + $0x250] sm:$0xff] %vm1773, %v1719
      %1849 = vst.msk [vmem:[%s170 + $0x258] sm:$0xff] %vm1773, %v1720
      %1850 = vst.msk [vmem:[%s170 + $0x260] sm:$0xff] %vm1773, %v1721
      %1851 = vst.msk [vmem:[%s170 + $0x268] sm:$0xff] %vm1773, %v1722
      %1852 = vst.msk [vmem:[%s170 + $0x270] sm:$0xff] %vm1773, %v1723
      %1853 = vst.msk [vmem:[%s170 + $0x278] sm:$0xff] %vm1773, %v1724
      %1854 = vst.msk [vmem:[%s170 + $0x280] sm:$0xff] %vm1773, %v1725
      %1855 = vst.msk [vmem:[%s170 + $0x288] sm:$0xff] %vm1773, %v1726
      %1856 = vst.msk [vmem:[%s170 + $0x290] sm:$0xff] %vm1773, %v1727
      %1857 = vst.msk [vmem:[%s170 + $0x298] sm:$0xff] %vm1773, %v1728
      %1858 = vst.msk [vmem:[%s170 + $0x2a0] sm:$0xff] %vm1773, %v1729
      %1859 = vst.msk [vmem:[%s170 + $0x2a8] sm:$0xff] %vm1773, %v1730
      %1860 = vst.msk [vmem:[%s170 + $0x2b0] sm:$0xff] %vm1773, %v1731
      %1861 = vst.msk [vmem:[%s170 + $0x2b8] sm:$0xff] %vm1773, %v1732
      %1862 = vst.msk [vmem:[%s170 + $0x2c0] sm:$0xff] %vm1773, %v1733
      %1863 = vst.msk [vmem:[%s170 + $0x2c8] sm:$0xff] %vm1773, %v1734
      %1864 = vst.msk [vmem:[%s170 + $0x2d0] sm:$0xff] %vm1773, %v1735
      %1865 = vst.msk [vmem:[%s170 + $0x2d8] sm:$0xff] %vm1773, %v1736
      %1866 = vst.msk [vmem:[%s170 + $0x2e0] sm:$0xff] %vm1773, %v1737
      %1867 = vst.msk [vmem:[%s170 + $0x2e8] sm:$0xff] %vm1773, %v1738
      %1868 = vst.msk [vmem:[%s170 + $0x2f0] sm:$0xff] %vm1773, %v1739
      %1869 = vst.msk [vmem:[%s170 + $0x2f8] sm:$0xff] %vm1773, %v1740
      %1870 = vst.msk [vmem:[%s170 + $0x300] sm:$0xff] %vm1773, %v1741
      %1871 = vst.msk [vmem:[%s170 + $0x308] sm:$0xff] %vm1773, %v1742
      %1872 = vst.msk [vmem:[%s170 + $0x310] sm:$0xff] %vm1773, %v1743
      %1873 = vst.msk [vmem:[%s170 + $0x318] sm:$0xff] %vm1773, %v1744
      %1874 = vst.msk [vmem:[%s170 + $0x320] sm:$0xff] %vm1773, %v1745
      %1875 = vst.msk [vmem:[%s170 + $0x328] sm:$0xff] %vm1773, %v1746
      %1876 = vst.msk [vmem:[%s170 + $0x330] sm:$0xff] %vm1773, %v1747
      %1877 = vst.msk [vmem:[%s170 + $0x338] sm:$0xff] %vm1773, %v1748
      %1878 = vst.msk [vmem:[%s170 + $0x340] sm:$0xff] %vm1773, %v1749
      %1879 = vst.msk [vmem:[%s170 + $0x348] sm:$0xff] %vm1773, %v1750
      %1880 = vst.msk [vmem:[%s170 + $0x350] sm:$0xff] %vm1773, %v1751
      %1881 = vst.msk [vmem:[%s170 + $0x358] sm:$0xff] %vm1773, %v1752
      %1882 = vst.msk [vmem:[%s170 + $0x360] sm:$0xff] %vm1773, %v1753
      %1883 = vst.msk [vmem:[%s170 + $0x368] sm:$0xff] %vm1773, %v1754
      %1884 = vst.msk [vmem:[%s170 + $0x370] sm:$0xff] %vm1773, %v1755
      %1885 = vst.msk [vmem:[%s170 + $0x378] sm:$0xff] %vm1773, %v1756
      %1886 = vst.msk [vmem:[%s170 + $0x380] sm:$0xff] %vm1773, %v1757
      %1887 = vst.msk [vmem:[%s170 + $0x388] sm:$0xff] %vm1773, %v1758
      %1888 = vst.msk [vmem:[%s170 + $0x390] sm:$0xff] %vm1773, %v1759
      %1889 = vst.msk [vmem:[%s170 + $0x398] sm:$0xff] %vm1773, %v1760
      %1890 = vst.msk [vmem:[%s170 + $0x3a0] sm:$0xff] %vm1773, %v1761
      %1891 = vst.msk [vmem:[%s170 + $0x3a8] sm:$0xff] %vm1773, %v1762
      %1892 = vst.msk [vmem:[%s170 + $0x3b0] sm:$0xff] %vm1773, %v1763
      %1893 = vst.msk [vmem:[%s170 + $0x3b8] sm:$0xff] %vm1773, %v1764
      %1894 = vst.msk [vmem:[%s170 + $0x3c0] sm:$0xff] %vm1773, %v1765
      %1895 = vst.msk [vmem:[%s170 + $0x3c8] sm:$0xff] %vm1773, %v1766
      %1896 = vst.msk [vmem:[%s170 + $0x3d0] sm:$0xff] %vm1773, %v1767
      %1897 = vst.msk [vmem:[%s170 + $0x3d8] sm:$0xff] %vm1773, %v1768
      %1898 = vst.msk [vmem:[%s170 + $0x3e0] sm:$0xff] %vm1773, %v1769
      %1899 = vst.msk [vmem:[%s170 + $0x3e8] sm:$0xff] %vm1773, %v1770
      %1900 = vst.msk [vmem:[%s170 + $0x3f0] sm:$0xff] %vm1773, %v1771
      %1901 = vst.msk [vmem:[%s170 + $0x3f8] sm:$0xff] %vm1773, %v1772
      %p1902 = scmp.lt.s32.totalorder %s14, 1
      %s1903 = scalar_select %p1902, %s14, 1
      %s1904 = smul.addr %s1903, 128
      %s1905 = smul.addr %s1904, 8
      %s1906 = scalar_lea.vmem %s3, %s1905
      // Predicated region
      $region33: #{tpu_custom_call.1} parent=31 // pred_check
        %p1907 = pneg %p100
      $region34: #{tpu_custom_call.1} parent=31 // pred_check_branch
        %1909 = sbr.rel (%p1907) target = $region36
      $region35: #{tpu_custom_call.1} parent=31 // pred_region
        _
      $region36: #{tpu_custom_call.1} parent=31 // pred_fallthru
        _
    $region32: #{tpu_custom_call.1} parent=5 // pred_fallthru
      _
    %p1910 = scmp.le.s32.totalorder 2, %s9
    // Predicated region
    $region37: #{tpu_custom_call.1} parent=5 // pred_check
      %p1911 = pneg %p1910
    $region38: #{tpu_custom_call.1} parent=5 // pred_check_branch
      %1913 = sbr.rel (%p1911) target = $region40
    $region39: #{tpu_custom_call.1} parent=5 // pred_region
      %s1914 = ssub.s32 %s9, 2
      // Predicated region
      $region41: #{tpu_custom_call.1} parent=39 // pred_check
        %p1915 = pneg %p106
      $region42: #{tpu_custom_call.1} parent=39 // pred_check_branch
        %1917 = sbr.rel (%p1915) target = $region44
      $region43: #{tpu_custom_call.1} parent=39 // pred_region
        %p1918 = scmp.lt.s32.totalorder %s15, 1
        %s1919 = scalar_select %p1918, %s15, 1
        %s1920 = smul.addr %s1919, 128
        %s1921 = smul.addr %s1920, 8
        %s1922 = scalar_lea.vmem %s3, %s1921
      $region44: #{tpu_custom_call.1} parent=39 // pred_fallthru
        _
    $region40: #{tpu_custom_call.1} parent=5 // pred_fallthru
      _
  $region6: #{tpu_custom_call.1} parent=0 // loop_footer
    %s13 = sadd.s32 1, %s9
  $region7: #{tpu_custom_call.1} parent=0 // loop_footer_branch
    %8 = sbr.rel target = $region3
  $region8: #{tpu_custom_call.1} parent=0 // loop_exit
    _

</llo_original>
